<compile_context>
chip_gen: v5e
topology: v5e:2x2
jax: 0.10.0
libtpu: 0.0.40
codegen_flags: <defaults>
</compile_context>

<pallas_src>
import functools

import jax
import jax.numpy as jnp
from jax.experimental import pallas as pl
from jax.experimental.pallas import tpu as pltpu

HIDDEN = 768          # RoBERTa hidden size
FF = 512              # classifier hidden width
NUM_POOL_LAYERS = 4   # last 4 hidden states are pooled


def _chip_defaults():
    """(w1_cls storage dtype, batch tile) per TPU generation.

    int8 weight storage only where the generation has an integer-friendly path and
    the dequant hides under DMA (v5e/v6e); v7x has no integer MXU path -> keep bf16.
    Batch tile matches MXU height (128 on v5e's 4x128x128, 256 on v6e/v7x 2x256x256).
    """
    try:
        kind = jax.devices()[0].device_kind.lower()
    except Exception:
        kind = ""
    if "v7" in kind:
        return "bf16", 256
    if "v6" in kind:
        return "int8", 256
    if "v5" in kind:
        return "int8", 128
    return "bf16", 256   # unknown / older generations: safe default


def _head_compute(cls_ref, add_ref, w1a_ref, w1c_bf16, w2_ref, b2_ref, out_ref):
    """Shared body. Shapes (per batch tile TB):
    cls_ref : [4, TB, 768] bf16   CLS token of last 4 backbone layers
    add_ref : [TB, A+1]    f32    add_vec with a constant-1 column appended
    w1a_ref : [A+1, 512]   f32    W1 rows for add_vec, last row = b1
    w1c_bf16: [768, 512]   bf16   W1 rows for pooled CLS, pre-scaled by 1/4
    w2_ref  : [512, C]     bf16
    b2_ref  : [1, C]       f32
    out_ref : [TB, C]      f32
    """
    # torch.mean(hidden_states[:, :, 0, :], dim=0): 3 full-vreg adds in f32 (chip
    # agnostic; v5e VPU has no bf16). The 1/4 factor is folded into w1_cls (exact).
    cls_sum = ((cls_ref[0].astype(jnp.float32) + cls_ref[1].astype(jnp.float32))
               + (cls_ref[2].astype(jnp.float32) + cls_ref[3].astype(jnp.float32)))

    # add_vec branch of the split concat-matmul: contraction dim A+1 (=3) is far too
    # small for the MXU -> broadcast-FMAs on the VPU. b1 rides along as the last row
    # (ones column in add_ref), so no separate bias broadcast / DMA.
    add = add_ref[...]                                                  # [TB, A+1]
    w1a = w1a_ref[...]                                                  # [A+1, 512]
    h = add[:, 0:1] * w1a[0:1, :]                                       # [TB, 512] f32
    for i in range(1, add.shape[1]):                                    # static A
        h = h + add[:, i:i + 1] * w1a[i:i + 1, :]

    # CLS branch: bf16 x bf16 MXU pass with f32 accumulation.
    h = h + jnp.dot(cls_sum.astype(jnp.bfloat16), w1c_bf16,
                    preferred_element_type=jnp.float32)                 # [TB, 512]
    h = jnp.maximum(h, 0.0)                                             # ReLU (f32, VPU)
    # TODO(synk): nn.Dropout(0.1) is identity in eval mode; train-mode dropout not implemented.

    out_ref[...] = (jnp.dot(h.astype(jnp.bfloat16), w2_ref[...],
                            preferred_element_type=jnp.float32)
                    + b2_ref[...])                                      # [TB, C]


def _head_kernel_bf16(cls_ref, add_ref, w1a_ref, w1c_ref, w2_ref, b2_ref, out_ref):
    _head_compute(cls_ref, add_ref, w1a_ref, w1c_ref[...], w2_ref, b2_ref, out_ref)


def _head_kernel_int8(cls_ref, add_ref, w1a_ref, w1c_ref, w1s_ref, w2_ref, b2_ref, out_ref):
    # Per-column dequant int8 -> bf16 on the VPU (hides under the weight DMA at this
    # problem size); MXU still accumulates in f32.
    w1c = (w1c_ref[...].astype(jnp.float32) * w1s_ref[...]).astype(jnp.bfloat16)
    _head_compute(cls_ref, add_ref, w1a_ref, w1c, w2_ref, b2_ref, out_ref)


def prepare_classifier_params(w1, b1, w2, b2, num_classes, w1_cls_dtype=None):
    """One-time (outside jit) weight prep: split / fold / scale / quantize.

    * Unaligned row-split of W1 hoisted out of the per-call path.
    * b1 folded into w1_add as an extra row (the wrapper appends a ones column).
    * 1/4 mean factor folded into the CLS block (exact power-of-two scale) BEFORE
      any narrowing cast/quantization.
    * w1_cls stored int8 + per-column f32 scale on v5e/v6e, bf16 elsewhere.
    * No lane padding of w2/b2: the padded lanes were >95% zeros of that read.
    """
    A = num_classes - 1
    C = num_classes
    assert w1.shape == (HIDDEN + A, FF) and w2.shape == (FF, C)
    if w1_cls_dtype is None:
        w1_cls_dtype, _ = _chip_defaults()

    w1_add = jnp.concatenate(
        [w1[:A, :], b1.reshape(1, FF)], axis=0).astype(jnp.float32)      # [A+1, 512]

    w1_cls_f32 = 0.25 * w1[A:, :].astype(jnp.float32)                    # mean folded, exact
    if w1_cls_dtype == "int8":
        col_max = jnp.max(jnp.abs(w1_cls_f32), axis=0, keepdims=True)    # [1, 512]
        scale = jnp.maximum(col_max, 1e-30) / 127.0
        w1_cls = jnp.clip(jnp.round(w1_cls_f32 / scale),
                          -127.0, 127.0).astype(jnp.int8)                # [768, 512] i8
        w1_scale = scale.astype(jnp.float32)                             # [1, 512] f32
    else:
        w1_cls = w1_cls_f32.astype(jnp.bfloat16)                         # [768, 512] bf16
        w1_scale = None

    w2_b = w2.astype(jnp.bfloat16)                                       # [512, C]
    b2_2d = b2.reshape(1, C).astype(jnp.float32)                         # [1, C]
    return w1_add, w1_cls, w1_scale, w2_b, b2_2d


@functools.partial(jax.jit, static_argnames=("num_classes", "batch_tile"))
def pooling_roberta_head(cls_stack, add_vec, params, *, num_classes, batch_tile=None):
    """cls_stack: [4, B, 768] (bf16 from the backbone); add_vec: [B, A];
    params: output of prepare_classifier_params. Returns [B, num_classes] f32.

    B <= batch_tile runs as a single invocation (this head is HBM/launch bound, so a
    K-grid would only add per-step overhead). Larger B uses a batch grid axis so the
    ~0.4-0.9 MiB of weights stays VMEM-resident across tiles and both v7x TensorCores
    can be used (dimension_semantics=("parallel",)).
    """
    w1_add, w1_cls, w1_scale, w2_b, b2_2d = params
    L, B, H = cls_stack.shape
    A = add_vec.shape[1]
    C = num_classes
    assert L == NUM_POOL_LAYERS and H == HIDDEN and A == C - 1

    if batch_tile is None:
        batch_tile = _chip_defaults()[1]

    # b1 lives in w1_add's last row -> append a constant-1 column to add_vec.
    add_aug = jnp.concatenate(
        [add_vec.astype(jnp.float32), jnp.ones((B, 1), jnp.float32)], axis=1)   # [B, A+1]

    if B <= batch_tile:
        tb, num_tiles, b_pad = B, 1, B
    else:
        tb = batch_tile
        num_tiles = pl.cdiv(B, tb)
        b_pad = num_tiles * tb
    if b_pad != B:
        cls_stack = jnp.pad(cls_stack, ((0, 0), (0, b_pad - B), (0, 0)))
        add_aug = jnp.pad(add_aug, ((0, b_pad - B), (0, 0)))

    quantized = w1_scale is not None

    in_specs = [
        pl.BlockSpec((L, tb, H), lambda i: (0, i, 0)),        # cls_stack (bf16)
        pl.BlockSpec((tb, A + 1), lambda i: (i, 0)),          # add_vec ⊕ ones
        pl.BlockSpec((A + 1, FF), lambda i: (0, 0)),          # w1_add (f32, b1 folded)
        pl.BlockSpec((H, FF), lambda i: (0, 0)),              # w1_cls (bf16 or int8)
    ]
    args = [cls_stack, add_aug, w1_add, w1_cls]
    if quantized:
        in_specs.append(pl.BlockSpec((1, FF), lambda i: (0, 0)))   # per-column scale
        args.append(w1_scale)
        kernel = _head_kernel_int8
    else:
        kernel = _head_kernel_bf16
    in_specs += [
        pl.BlockSpec((FF, C), lambda i: (0, 0)),              # w2 (bf16, unpadded)
        pl.BlockSpec((1, C), lambda i: (0, 0)),               # b2
    ]
    args += [w2_b, b2_2d]

    out = pl.pallas_call(
        kernel,
        out_shape=jax.ShapeDtypeStruct((b_pad, C), jnp.float32),
        grid=(num_tiles,),
        in_specs=in_specs,
        out_specs=pl.BlockSpec((tb, C), lambda i: (i, 0)),
        compiler_params=pltpu.CompilerParams(dimension_semantics=("parallel",)),
    )(*args)
    return out[:B]


def synthetic_backbone_last4_cls(input_ids, attention_mask, key):
    """Deterministic stand-in for RobertaModel(...).hidden_states[-4:][:, :, 0, :].

    TODO(synk): the real RoBERTa transformer backbone is not translated to Pallas;
    this produces deterministic per-layer CLS embeddings of the right shape, handed
    to the head in bf16 (cast at the backbone output, per perf review).
    """
    B, S = input_ids.shape
    vocab = 256
    k_emb, k_layer = jax.random.split(key)
    emb = jax.random.normal(k_emb, (vocab, HIDDEN), jnp.float32) * 0.02
    tok = emb[input_ids]                                        # [B, S, 768]
    masked = tok * attention_mask[..., None].astype(jnp.float32)
    base_cls = masked[:, 0, :] + 0.1 * masked.mean(axis=1)      # [B, 768]
    layer_scale = jax.random.normal(k_layer, (NUM_POOL_LAYERS, 1, HIDDEN),
                                    jnp.float32) * 0.05
    cls_stack = base_cls[None, :, :] * (1.0 + layer_scale)      # [4, B, 768]
    return cls_stack.astype(jnp.bfloat16)


def reference_head(cls_stack, add_vec, w1, b1, w2, b2):
    """Pure f32 reference of the module's post-backbone forward."""
    cls_mean = jnp.mean(cls_stack.astype(jnp.float32), axis=0)  # [B, 768]
    x = jnp.concatenate([add_vec, cls_mean], axis=1)            # [B, 768 + A]
    h = jnp.maximum(x @ w1 + b1, 0.0)
    return h @ w2 + b2


if __name__ == "__main__":
    num_classes = 3
    A = num_classes - 1
    B, S = 8, 8

    key = jax.random.PRNGKey(0)
    k_ids, k_add, k_bb, k_w1, k_b1, k_w2, k_b2 = jax.random.split(key, 7)

    input_ids = jax.random.randint(k_ids, (B, S), 0, 256, dtype=jnp.int32)
    attention_mask = jnp.ones((B, S), dtype=jnp.int32)
    add_vec = jax.random.normal(k_add, (B, A), jnp.float32)

    # classifier params (nn.Linear(768 + num_classes - 1, 512), nn.Linear(512, num_classes))
    d_in = HIDDEN + A
    lim1 = 1.0 / jnp.sqrt(d_in)
    lim2 = 1.0 / jnp.sqrt(FF)
    w1 = jax.random.uniform(k_w1, (d_in, FF), jnp.float32, -lim1, lim1)
    b1 = jax.random.uniform(k_b1, (FF,), jnp.float32, -lim1, lim1)
    w2 = jax.random.uniform(k_w2, (FF, num_classes), jnp.float32, -lim2, lim2)
    b2 = jax.random.uniform(k_b2, (num_classes,), jnp.float32, -lim2, lim2)

    cls_stack = synthetic_backbone_last4_cls(input_ids, attention_mask, k_bb)

    # One-time weight prep (split / fold b1 / scale / quantize) outside jit.
    params = prepare_classifier_params(w1, b1, w2, b2, num_classes)

    out = pooling_roberta_head(cls_stack, add_vec, params, num_classes=num_classes)
    out = jax.block_until_ready(out)

    ref = reference_head(cls_stack, add_vec, w1, b1, w2, b2)
    assert out.shape == (B, num_classes)
    # Tolerance absorbs bf16 activation casts and int8/bf16 weight quantization
    # (f32 MXU accumulation is kept throughout).
    assert jnp.allclose(out, ref, atol=5e-3, rtol=1e-2), (out, ref)
    print("KERNEL_OK")
</pallas_src>

<mosaic_0001>
module attributes {stable_mosaic.version = 11 : i64} {
  func.func @_head_kernel_bf16(%arg0: i32, %arg1: memref<4x8x768xbf16, #tpu.memory_space<vmem>>, %arg2: memref<8x3xf32, #tpu.memory_space<vmem>>, %arg3: memref<3x512xf32, #tpu.memory_space<vmem>>, %arg4: memref<768x512xbf16, #tpu.memory_space<vmem>>, %arg5: memref<512x3xbf16, #tpu.memory_space<vmem>>, %arg6: memref<1x3xf32, #tpu.memory_space<vmem>>, %arg7: memref<8x3xf32, #tpu.memory_space<vmem>>) attributes {dimension_semantics = [#tpu.dimension_semantics<parallel>], iteration_bounds = array<i64: 1>, scalar_prefetch = 0 : i64, scratch_operands = 0 : i64, tpu.core_type = #tpu.core_type<tc>, window_params = [{transform_indices = @transform_0, window_bounds = array<i64: 4, 8, 768>}, {transform_indices = @transform_1, window_bounds = array<i64: 8, 3>}, {pipeline_mode = #tpu.pipeline_mode<synchronous>, transform_indices = @transform_2, window_bounds = array<i64: 3, 512>}, {pipeline_mode = #tpu.pipeline_mode<synchronous>, transform_indices = @transform_3, window_bounds = array<i64: 768, 512>}, {pipeline_mode = #tpu.pipeline_mode<synchronous>, transform_indices = @transform_4, window_bounds = array<i64: 512, 3>}, {pipeline_mode = #tpu.pipeline_mode<synchronous>, transform_indices = @transform_5, window_bounds = array<i64: 1, 3>}, {transform_indices = @transform_6, window_bounds = array<i64: 8, 3>}]} {
    %c0 = arith.constant 0 : index
    %c0_0 = arith.constant 0 : index
    %0 = vector.load %arg4[%c0, %c0_0] : memref<768x512xbf16, #tpu.memory_space<vmem>>, vector<768x512xbf16>
    %c0_1 = arith.constant 0 : index
    %c0_2 = arith.constant 0 : index
    %c0_3 = arith.constant 0 : index
    %1 = vector.load %arg1[%c0_1, %c0_2, %c0_3] : memref<4x8x768xbf16, #tpu.memory_space<vmem>>, vector<1x8x768xbf16>
    %2 = vector.shape_cast %1 : vector<1x8x768xbf16> to vector<8x768xbf16>
    %3 = arith.extf %2 : vector<8x768xbf16> to vector<8x768xf32>
    %c1 = arith.constant 1 : index
    %c0_4 = arith.constant 0 : index
    %c0_5 = arith.constant 0 : index
    %4 = vector.load %arg1[%c1, %c0_4, %c0_5] : memref<4x8x768xbf16, #tpu.memory_space<vmem>>, vector<1x8x768xbf16>
    %5 = vector.shape_cast %4 : vector<1x8x768xbf16> to vector<8x768xbf16>
    %6 = arith.extf %5 : vector<8x768xbf16> to vector<8x768xf32>
    %7 = arith.addf %3, %6 : vector<8x768xf32>
    %c2 = arith.constant 2 : index
    %c0_6 = arith.constant 0 : index
    %c0_7 = arith.constant 0 : index
    %8 = vector.load %arg1[%c2, %c0_6, %c0_7] : memref<4x8x768xbf16, #tpu.memory_space<vmem>>, vector<1x8x768xbf16>
    %9 = vector.shape_cast %8 : vector<1x8x768xbf16> to vector<8x768xbf16>
    %10 = arith.extf %9 : vector<8x768xbf16> to vector<8x768xf32>
    %c3 = arith.constant 3 : index
    %c0_8 = arith.constant 0 : index
    %c0_9 = arith.constant 0 : index
    %11 = vector.load %arg1[%c3, %c0_8, %c0_9] : memref<4x8x768xbf16, #tpu.memory_space<vmem>>, vector<1x8x768xbf16>
    %12 = vector.shape_cast %11 : vector<1x8x768xbf16> to vector<8x768xbf16>
    %13 = arith.extf %12 : vector<8x768xbf16> to vector<8x768xf32>
    %14 = arith.addf %10, %13 : vector<8x768xf32>
    %15 = arith.addf %7, %14 : vector<8x768xf32>
    %c0_10 = arith.constant 0 : index
    %c0_11 = arith.constant 0 : index
    %16 = vector.load %arg2[%c0_10, %c0_11] : memref<8x3xf32, #tpu.memory_space<vmem>>, vector<8x3xf32>
    %c0_12 = arith.constant 0 : index
    %c0_13 = arith.constant 0 : index
    %17 = vector.load %arg3[%c0_12, %c0_13] : memref<3x512xf32, #tpu.memory_space<vmem>>, vector<3x512xf32>
    %18 = vector.extract_strided_slice %16 {offsets = [0, 0], sizes = [8, 1], strides = [1, 1]} : vector<8x3xf32> to vector<8x1xf32>
    %19 = vector.extract_strided_slice %17 {offsets = [0, 0], sizes = [1, 512], strides = [1, 1]} : vector<3x512xf32> to vector<1x512xf32>
    %20 = vector.broadcast %18 : vector<8x1xf32> to vector<8x512xf32>
    %21 = vector.broadcast %19 : vector<1x512xf32> to vector<8x512xf32>
    %22 = arith.mulf %20, %21 : vector<8x512xf32>
    %23 = vector.extract_strided_slice %16 {offsets = [0, 1], sizes = [8, 1], strides = [1, 1]} : vector<8x3xf32> to vector<8x1xf32>
    %24 = vector.extract_strided_slice %17 {offsets = [1, 0], sizes = [1, 512], strides = [1, 1]} : vector<3x512xf32> to vector<1x512xf32>
    %25 = vector.broadcast %23 : vector<8x1xf32> to vector<8x512xf32>
    %26 = vector.broadcast %24 : vector<1x512xf32> to vector<8x512xf32>
    %27 = arith.mulf %25, %26 : vector<8x512xf32>
    %28 = arith.addf %22, %27 : vector<8x512xf32>
    %29 = vector.extract_strided_slice %16 {offsets = [0, 2], sizes = [8, 1], strides = [1, 1]} : vector<8x3xf32> to vector<8x1xf32>
    %30 = vector.extract_strided_slice %17 {offsets = [2, 0], sizes = [1, 512], strides = [1, 1]} : vector<3x512xf32> to vector<1x512xf32>
    %31 = vector.broadcast %29 : vector<8x1xf32> to vector<8x512xf32>
    %32 = vector.broadcast %30 : vector<1x512xf32> to vector<8x512xf32>
    %33 = arith.mulf %31, %32 : vector<8x512xf32>
    %34 = arith.addf %28, %33 : vector<8x512xf32>
    %35 = arith.truncf %15 : vector<8x768xf32> to vector<8x768xbf16>
    %cst = arith.constant dense<0.000000e+00> : vector<8x512xf32>
    %36 = tpu.matmul %35, %0, %cst {dimension_numbers = #tpu.dot_dimension_numbers<[1], [0], [0], [1], [0, 0, 1, 1], [], []>} : vector<8x768xbf16>, vector<768x512xbf16>, vector<8x512xf32> -> vector<8x512xf32>
    %37 = arith.addf %34, %36 : vector<8x512xf32>
    %cst_14 = arith.constant 0.000000e+00 : f32
    %38 = vector.broadcast %cst_14 : f32 to vector<8x512xf32>
    %39 = arith.maximumf %37, %38 : vector<8x512xf32>
    %40 = arith.truncf %39 : vector<8x512xf32> to vector<8x512xbf16>
    %c0_15 = arith.constant 0 : index
    %c0_16 = arith.constant 0 : index
    %41 = vector.load %arg5[%c0_15, %c0_16] : memref<512x3xbf16, #tpu.memory_space<vmem>>, vector<512x3xbf16>
    %cst_17 = arith.constant dense<0.000000e+00> : vector<8x3xf32>
    %42 = tpu.matmul %40, %41, %cst_17 {dimension_numbers = #tpu.dot_dimension_numbers<[1], [0], [0], [1], [0, 0, 1, 1], [], []>} : vector<8x512xbf16>, vector<512x3xbf16>, vector<8x3xf32> -> vector<8x3xf32>
    %c0_18 = arith.constant 0 : index
    %c0_19 = arith.constant 0 : index
    %43 = vector.load %arg6[%c0_18, %c0_19] : memref<1x3xf32, #tpu.memory_space<vmem>>, vector<1x3xf32>
    %44 = vector.broadcast %43 : vector<1x3xf32> to vector<8x3xf32>
    %45 = arith.addf %42, %44 : vector<8x3xf32>
    %c0_20 = arith.constant 0 : index
    %c0_21 = arith.constant 0 : index
    %46 = vector.load %arg7[%c0_20, %c0_21] : memref<8x3xf32, #tpu.memory_space<vmem>>, vector<8x3xf32>
    tpu.vector_store %arg7[%c0_20, %c0_21], %45 {strides = array<i32>} : memref<8x3xf32, #tpu.memory_space<vmem>>, vector<8x3xf32>,
    return
  }
  func.func @transform_0(%arg0: i32) -> (i32, i32, i32) {
    %c0_i32 = arith.constant 0 : i32
    %c0_i32_0 = arith.constant 0 : i32
    %c0_i32_1 = arith.constant 0 : i32
    return %c0_i32, %arg0, %c0_i32_0 : i32, i32, i32
  }
  func.func @transform_1(%arg0: i32) -> (i32, i32) {
    %c0_i32 = arith.constant 0 : i32
    %c0_i32_0 = arith.constant 0 : i32
    return %arg0, %c0_i32 : i32, i32
  }
  func.func @transform_2(%arg0: i32) -> (i32, i32) {
    %c0_i32 = arith.constant 0 : i32
    %c0_i32_0 = arith.constant 0 : i32
    %c0_i32_1 = arith.constant 0 : i32
    return %c0_i32, %c0_i32_0 : i32, i32
  }
  func.func @transform_3(%arg0: i32) -> (i32, i32) {
    %c0_i32 = arith.constant 0 : i32
    %c0_i32_0 = arith.constant 0 : i32
    %c0_i32_1 = arith.constant 0 : i32
    return %c0_i32, %c0_i32_0 : i32, i32
  }
  func.func @transform_4(%arg0: i32) -> (i32, i32) {
    %c0_i32 = arith.constant 0 : i32
    %c0_i32_0 = arith.constant 0 : i32
    %c0_i32_1 = arith.constant 0 : i32
    return %c0_i32, %c0_i32_0 : i32, i32
  }
  func.func @transform_5(%arg0: i32) -> (i32, i32) {
    %c0_i32 = arith.constant 0 : i32
    %c0_i32_0 = arith.constant 0 : i32
    %c0_i32_1 = arith.constant 0 : i32
    return %c0_i32, %c0_i32_0 : i32, i32
  }
  func.func @transform_6(%arg0: i32) -> (i32, i32) {
    %c0_i32 = arith.constant 0 : i32
    %c0_i32_0 = arith.constant 0 : i32
    return %arg0, %c0_i32 : i32, i32
  }
}

</mosaic_0001>

<llo_original>
// kernel: pooling_roberta_head.1
$region0: #{pooling_roberta_head.1}
  #allocation0 [shape = 'u32[]', space=smem, size = 0x4, offset = 0x4, fixed_abs, tag = 'smem constant byte address 0x4 - core index']
  #allocation1 [shape = 'u32[72,128]{1,0:T(1,128)}', space=vmem, size = 0x9000, scoped, tag = 'internal scratch']
  %s0 = inlined_call_operand.vmem [shape: bf16[4,8,768], index: 0, kind: input, shape index: {}]
  %s1 = inlined_call_operand.vmem [shape: f32[8,3], index: 1, kind: input, shape index: {}]
  %s2 = inlined_call_operand.vmem [shape: f32[3,512], index: 2, kind: input, shape index: {}]
  %s3 = inlined_call_operand.hbm [shape: bf16[768,512], index: 3, kind: input, shape index: {}]
  %s4 = inlined_call_operand.vmem [shape: bf16[512,3], index: 4, kind: input, shape index: {}]
  %s5 = inlined_call_operand.vmem [shape: f32[1,3], index: 5, kind: input, shape index: {}]
  %s6 = inlined_call_operand.vmem [shape: f32[8,3], index: 6, kind: output, shape index: {}]
  %s7 = sld [smem:[#allocation0]]
  $region38: #{pooling_roberta_head.1} parent=0
    _
  %s9 = ssub.s32 1, %s7
  %s10 = scalar_select 0, %s9, %s7
  $region1: #{pooling_roberta_head.1} parent=0
    #allocation2 [shape = 'u8[786432]{0}', space=vmem, size = 0xc0000, scoped, tag = 'input window, operand 3, single buffered']
    #allocation3 [shape = 's32[1]{0}', space=sflag, size = 0x4, scoped, tag = 'scoped memory for pooling_roberta_head.1']
    %11 = vsyncpa [#allocation3], 0
    // Predicated region
    $region2: #{pooling_roberta_head.1} parent=1 // pred_check
      _
    $region3: #{pooling_roberta_head.1} parent=1 // pred_check_branch
      %13 = sbr.rel (0) target = $region5
    $region4: #{pooling_roberta_head.1} parent=1 // pred_region
      _
    $region5: #{pooling_roberta_head.1} parent=1 // pred_fallthru
      _
    // Predicated region
    $region6: #{pooling_roberta_head.1} parent=1 // pred_check
      _
    $region7: #{pooling_roberta_head.1} parent=1 // pred_check_branch
      %15 = sbr.rel (0) target = $region9
    $region8: #{pooling_roberta_head.1} parent=1 // pred_region
      _
    $region9: #{pooling_roberta_head.1} parent=1 // pred_fallthru
      _
    // Predicated region
    $region10: #{pooling_roberta_head.1} parent=1 // pred_check
      _
    $region11: #{pooling_roberta_head.1} parent=1 // pred_check_branch
      %17 = sbr.rel (0) target = $region13
    $region12: #{pooling_roberta_head.1} parent=1 // pred_region
      _
    $region13: #{pooling_roberta_head.1} parent=1 // pred_fallthru
      _
    // Predicated region
    $region14: #{pooling_roberta_head.1} parent=1 // pred_check
      _
    $region15: #{pooling_roberta_head.1} parent=1 // pred_check_branch
      %19 = sbr.rel (0) target = $region17
    $region16: #{pooling_roberta_head.1} parent=1 // pred_region
      %21 = vsyncadd [#allocation3], 0
      %s22 = sshll.u32 %s3, 4
      %s23 = int_to_ptr.hbm [resolvable:$true] %s22
      %s24 = sshll.u32 [#allocation2], 4
      %s25 = int_to_ptr.vmem [resolvable:$true] %s24
      %30 = dma.hbm_to_vmem [thread:$0]  %s23, 24576, %s25, [#allocation3], 256, 256, 16
    $region17: #{pooling_roberta_head.1} parent=1 // pred_fallthru
      _
    // Predicated region
    $region18: #{pooling_roberta_head.1} parent=1 // pred_check
      _
    $region19: #{pooling_roberta_head.1} parent=1 // pred_check_branch
      %32 = sbr.rel (0) target = $region21
    $region20: #{pooling_roberta_head.1} parent=1 // pred_region
      _
    $region21: #{pooling_roberta_head.1} parent=1 // pred_fallthru
      _
    // Predicated region
    $region22: #{pooling_roberta_head.1} parent=1 // pred_check
      _
    $region23: #{pooling_roberta_head.1} parent=1 // pred_check_branch
      %34 = sbr.rel (0) target = $region25
    $region24: #{pooling_roberta_head.1} parent=1 // pred_region
      _
    $region25: #{pooling_roberta_head.1} parent=1 // pred_fallthru
      _
    // Predicated region
    $region26: #{pooling_roberta_head.1} parent=1 // pred_check
      _
    $region27: #{pooling_roberta_head.1} parent=1 // pred_check_branch
      %36 = sbr.rel (0) target = $region29
    $region28: #{pooling_roberta_head.1} parent=1 // pred_region
      %38 = dma.done [#allocation3], 24576
    $region29: #{pooling_roberta_head.1} parent=1 // pred_fallthru
      _
    %v39 = vld [vmem:[#allocation2] sm:$0xff]
    %v40 = vld [vmem:[#allocation2 + $0x8] sm:$0xff]
    %v41 = vld [vmem:[#allocation2 + $0x10] sm:$0xff]
    %v42 = vld [vmem:[#allocation2 + $0x18] sm:$0xff]
    %v43 = vld [vmem:[#allocation2 + $0x20] sm:$0xff]
    %v44 = vld [vmem:[#allocation2 + $0x28] sm:$0xff]
    %v45 = vld [vmem:[#allocation2 + $0x30] sm:$0xff]
    %v46 = vld [vmem:[#allocation2 + $0x38] sm:$0xff]
    %v47 = vld [vmem:[#allocation2 + $0x40] sm:$0xff]
    %v48 = vld [vmem:[#allocation2 + $0x48] sm:$0xff]
    %v49 = vld [vmem:[#allocation2 + $0x50] sm:$0xff]
    %v50 = vld [vmem:[#allocation2 + $0x58] sm:$0xff]
    %v51 = vld [vmem:[#allocation2 + $0x60] sm:$0xff]
    %v52 = vld [vmem:[#allocation2 + $0x68] sm:$0xff]
    %v53 = vld [vmem:[#allocation2 + $0x70] sm:$0xff]
    %v54 = vld [vmem:[#allocation2 + $0x78] sm:$0xff]
    %v55 = vld [vmem:[#allocation2 + $0x80] sm:$0xff]
    %v56 = vld [vmem:[#allocation2 + $0x88] sm:$0xff]
    %v57 = vld [vmem:[#allocation2 + $0x90] sm:$0xff]
    %v58 = vld [vmem:[#allocation2 + $0x98] sm:$0xff]
    %v59 = vld [vmem:[#allocation2 + $0xa0] sm:$0xff]
    %v60 = vld [vmem:[#allocation2 + $0xa8] sm:$0xff]
    %v61 = vld [vmem:[#allocation2 + $0xb0] sm:$0xff]
    %v62 = vld [vmem:[#allocation2 + $0xb8] sm:$0xff]
    %v63 = vld [vmem:[#allocation2 + $0xc0] sm:$0xff]
    %v64 = vld [vmem:[#allocation2 + $0xc8] sm:$0xff]
    %v65 = vld [vmem:[#allocation2 + $0xd0] sm:$0xff]
    %v66 = vld [vmem:[#allocation2 + $0xd8] sm:$0xff]
    %v67 = vld [vmem:[#allocation2 + $0xe0] sm:$0xff]
    %v68 = vld [vmem:[#allocation2 + $0xe8] sm:$0xff]
    %v69 = vld [vmem:[#allocation2 + $0xf0] sm:$0xff]
    %v70 = vld [vmem:[#allocation2 + $0xf8] sm:$0xff]
    %v71 = vld [vmem:[#allocation2 + $0x100] sm:$0xff]
    %v72 = vld [vmem:[#allocation2 + $0x108] sm:$0xff]
    %v73 = vld [vmem:[#allocation2 + $0x110] sm:$0xff]
    %v74 = vld [vmem:[#allocation2 + $0x118] sm:$0xff]
    %v75 = vld [vmem:[#allocation2 + $0x120] sm:$0xff]
    %v76 = vld [vmem:[#allocation2 + $0x128] sm:$0xff]
    %v77 = vld [vmem:[#allocation2 + $0x130] sm:$0xff]
    %v78 = vld [vmem:[#allocation2 + $0x138] sm:$0xff]
    %v79 = vld [vmem:[#allocation2 + $0x140] sm:$0xff]
    %v80 = vld [vmem:[#allocation2 + $0x148] sm:$0xff]
    %v81 = vld [vmem:[#allocation2 + $0x150] sm:$0xff]
    %v82 = vld [vmem:[#allocation2 + $0x158] sm:$0xff]
    %v83 = vld [vmem:[#allocation2 + $0x160] sm:$0xff]
    %v84 = vld [vmem:[#allocation2 + $0x168] sm:$0xff]
    %v85 = vld [vmem:[#allocation2 + $0x170] sm:$0xff]
    %v86 = vld [vmem:[#allocation2 + $0x178] sm:$0xff]
    %v87 = vld [vmem:[#allocation2 + $0x180] sm:$0xff]
    %v88 = vld [vmem:[#allocation2 + $0x188] sm:$0xff]
    %v89 = vld [vmem:[#allocation2 + $0x190] sm:$0xff]
    %v90 = vld [vmem:[#allocation2 + $0x198] sm:$0xff]
    %v91 = vld [vmem:[#allocation2 + $0x1a0] sm:$0xff]
    %v92 = vld [vmem:[#allocation2 + $0x1a8] sm:$0xff]
    %v93 = vld [vmem:[#allocation2 + $0x1b0] sm:$0xff]
    %v94 = vld [vmem:[#allocation2 + $0x1b8] sm:$0xff]
    %v95 = vld [vmem:[#allocation2 + $0x1c0] sm:$0xff]
    %v96 = vld [vmem:[#allocation2 + $0x1c8] sm:$0xff]
    %v97 = vld [vmem:[#allocation2 + $0x1d0] sm:$0xff]
    %v98 = vld [vmem:[#allocation2 + $0x1d8] sm:$0xff]
    %v99 = vld [vmem:[#allocation2 + $0x1e0] sm:$0xff]
    %v100 = vld [vmem:[#allocation2 + $0x1e8] sm:$0xff]
    %v101 = vld [vmem:[#allocation2 + $0x1f0] sm:$0xff]
    %v102 = vld [vmem:[#allocation2 + $0x1f8] sm:$0xff]
    %v103 = vld [vmem:[#allocation2 + $0x200] sm:$0xff]
    %v104 = vld [vmem:[#allocation2 + $0x208] sm:$0xff]
    %v105 = vld [vmem:[#allocation2 + $0x210] sm:$0xff]
    %v106 = vld [vmem:[#allocation2 + $0x218] sm:$0xff]
    %v107 = vld [vmem:[#allocation2 + $0x220] sm:$0xff]
    %v108 = vld [vmem:[#allocation2 + $0x228] sm:$0xff]
    %v109 = vld [vmem:[#allocation2 + $0x230] sm:$0xff]
    %v110 = vld [vmem:[#allocation2 + $0x238] sm:$0xff]
    %v111 = vld [vmem:[#allocation2 + $0x240] sm:$0xff]
    %v112 = vld [vmem:[#allocation2 + $0x248] sm:$0xff]
    %v113 = vld [vmem:[#allocation2 + $0x250] sm:$0xff]
    %v114 = vld [vmem:[#allocation2 + $0x258] sm:$0xff]
    %v115 = vld [vmem:[#allocation2 + $0x260] sm:$0xff]
    %v116 = vld [vmem:[#allocation2 + $0x268] sm:$0xff]
    %v117 = vld [vmem:[#allocation2 + $0x270] sm:$0xff]
    %v118 = vld [vmem:[#allocation2 + $0x278] sm:$0xff]
    %v119 = vld [vmem:[#allocation2 + $0x280] sm:$0xff]
    %v120 = vld [vmem:[#allocation2 + $0x288] sm:$0xff]
    %v121 = vld [vmem:[#allocation2 + $0x290] sm:$0xff]
    %v122 = vld [vmem:[#allocation2 + $0x298] sm:$0xff]
    %v123 = vld [vmem:[#allocation2 + $0x2a0] sm:$0xff]
    %v124 = vld [vmem:[#allocation2 + $0x2a8] sm:$0xff]
    %v125 = vld [vmem:[#allocation2 + $0x2b0] sm:$0xff]
    %v126 = vld [vmem:[#allocation2 + $0x2b8] sm:$0xff]
    %v127 = vld [vmem:[#allocation2 + $0x2c0] sm:$0xff]
    %v128 = vld [vmem:[#allocation2 + $0x2c8] sm:$0xff]
    %v129 = vld [vmem:[#allocation2 + $0x2d0] sm:$0xff]
    %v130 = vld [vmem:[#allocation2 + $0x2d8] sm:$0xff]
    %v131 = vld [vmem:[#allocation2 + $0x2e0] sm:$0xff]
    %v132 = vld [vmem:[#allocation2 + $0x2e8] sm:$0xff]
    %v133 = vld [vmem:[#allocation2 + $0x2f0] sm:$0xff]
    %v134 = vld [vmem:[#allocation2 + $0x2f8] sm:$0xff]
    %v135 = vld [vmem:[#allocation2 + $0x300] sm:$0xff]
    %v136 = vld [vmem:[#allocation2 + $0x308] sm:$0xff]
    %v137 = vld [vmem:[#allocation2 + $0x310] sm:$0xff]
    %v138 = vld [vmem:[#allocation2 + $0x318] sm:$0xff]
    %v139 = vld [vmem:[#allocation2 + $0x320] sm:$0xff]
    %v140 = vld [vmem:[#allocation2 + $0x328] sm:$0xff]
    %v141 = vld [vmem:[#allocation2 + $0x330] sm:$0xff]
    %v142 = vld [vmem:[#allocation2 + $0x338] sm:$0xff]
    %v143 = vld [vmem:[#allocation2 + $0x340] sm:$0xff]
    %v144 = vld [vmem:[#allocation2 + $0x348] sm:$0xff]
    %v145 = vld [vmem:[#allocation2 + $0x350] sm:$0xff]
    %v146 = vld [vmem:[#allocation2 + $0x358] sm:$0xff]
    %v147 = vld [vmem:[#allocation2 + $0x360] sm:$0xff]
    %v148 = vld [vmem:[#allocation2 + $0x368] sm:$0xff]
    %v149 = vld [vmem:[#allocation2 + $0x370] sm:$0xff]
    %v150 = vld [vmem:[#allocation2 + $0x378] sm:$0xff]
    %v151 = vld [vmem:[#allocation2 + $0x380] sm:$0xff]
    %v152 = vld [vmem:[#allocation2 + $0x388] sm:$0xff]
    %v153 = vld [vmem:[#allocation2 + $0x390] sm:$0xff]
    %v154 = vld [vmem:[#allocation2 + $0x398] sm:$0xff]
    %v155 = vld [vmem:[#allocation2 + $0x3a0] sm:$0xff]
    %v156 = vld [vmem:[#allocation2 + $0x3a8] sm:$0xff]
    %v157 = vld [vmem:[#allocation2 + $0x3b0] sm:$0xff]
    %v158 = vld [vmem:[#allocation2 + $0x3b8] sm:$0xff]
    %v159 = vld [vmem:[#allocation2 + $0x3c0] sm:$0xff]
    %v160 = vld [vmem:[#allocation2 + $0x3c8] sm:$0xff]
    %v161 = vld [vmem:[#allocation2 + $0x3d0] sm:$0xff]
    %v162 = vld [vmem:[#allocation2 + $0x3d8] sm:$0xff]
    %v163 = vld [vmem:[#allocation2 + $0x3e0] sm:$0xff]
    %v164 = vld [vmem:[#allocation2 + $0x3e8] sm:$0xff]
    %v165 = vld [vmem:[#allocation2 + $0x3f0] sm:$0xff]
    %v166 = vld [vmem:[#allocation2 + $0x3f8] sm:$0xff]
    %v167 = vld [vmem:[#allocation2 + $0x400] sm:$0xff]
    %v168 = vld [vmem:[#allocation2 + $0x408] sm:$0xff]
    %v169 = vld [vmem:[#allocation2 + $0x410] sm:$0xff]
    %v170 = vld [vmem:[#allocation2 + $0x418] sm:$0xff]
    %v171 = vld [vmem:[#allocation2 + $0x420] sm:$0xff]
    %v172 = vld [vmem:[#allocation2 + $0x428] sm:$0xff]
    %v173 = vld [vmem:[#allocation2 + $0x430] sm:$0xff]
    %v174 = vld [vmem:[#allocation2 + $0x438] sm:$0xff]
    %v175 = vld [vmem:[#allocation2 + $0x440] sm:$0xff]
    %v176 = vld [vmem:[#allocation2 + $0x448] sm:$0xff]
    %v177 = vld [vmem:[#allocation2 + $0x450] sm:$0xff]
    %v178 = vld [vmem:[#allocation2 + $0x458] sm:$0xff]
    %v179 = vld [vmem:[#allocation2 + $0x460] sm:$0xff]
    %v180 = vld [vmem:[#allocation2 + $0x468] sm:$0xff]
    %v181 = vld [vmem:[#allocation2 + $0x470] sm:$0xff]
    %v182 = vld [vmem:[#allocation2 + $0x478] sm:$0xff]
    %v183 = vld [vmem:[#allocation2 + $0x480] sm:$0xff]
    %v184 = vld [vmem:[#allocation2 + $0x488] sm:$0xff]
    %v185 = vld [vmem:[#allocation2 + $0x490] sm:$0xff]
    %v186 = vld [vmem:[#allocation2 + $0x498] sm:$0xff]
    %v187 = vld [vmem:[#allocation2 + $0x4a0] sm:$0xff]
    %v188 = vld [vmem:[#allocation2 + $0x4a8] sm:$0xff]
    %v189 = vld [vmem:[#allocation2 + $0x4b0] sm:$0xff]
    %v190 = vld [vmem:[#allocation2 + $0x4b8] sm:$0xff]
    %v191 = vld [vmem:[#allocation2 + $0x4c0] sm:$0xff]
    %v192 = vld [vmem:[#allocation2 + $0x4c8] sm:$0xff]
    %v193 = vld [vmem:[#allocation2 + $0x4d0] sm:$0xff]
    %v194 = vld [vmem:[#allocation2 + $0x4d8] sm:$0xff]
    %v195 = vld [vmem:[#allocation2 + $0x4e0] sm:$0xff]
    %v196 = vld [vmem:[#allocation2 + $0x4e8] sm:$0xff]
    %v197 = vld [vmem:[#allocation2 + $0x4f0] sm:$0xff]
    %v198 = vld [vmem:[#allocation2 + $0x4f8] sm:$0xff]
    %v199 = vld [vmem:[#allocation2 + $0x500] sm:$0xff]
    %v200 = vld [vmem:[#allocation2 + $0x508] sm:$0xff]
    %v201 = vld [vmem:[#allocation2 + $0x510] sm:$0xff]
    %v202 = vld [vmem:[#allocation2 + $0x518] sm:$0xff]
    %v203 = vld [vmem:[#allocation2 + $0x520] sm:$0xff]
    %v204 = vld [vmem:[#allocation2 + $0x528] sm:$0xff]
    %v205 = vld [vmem:[#allocation2 + $0x530] sm:$0xff]
    %v206 = vld [vmem:[#allocation2 + $0x538] sm:$0xff]
    %v207 = vld [vmem:[#allocation2 + $0x540] sm:$0xff]
    %v208 = vld [vmem:[#allocation2 + $0x548] sm:$0xff]
    %v209 = vld [vmem:[#allocation2 + $0x550] sm:$0xff]
    %v210 = vld [vmem:[#allocation2 + $0x558] sm:$0xff]
    %v211 = vld [vmem:[#allocation2 + $0x560] sm:$0xff]
    %v212 = vld [vmem:[#allocation2 + $0x568] sm:$0xff]
    %v213 = vld [vmem:[#allocation2 + $0x570] sm:$0xff]
    %v214 = vld [vmem:[#allocation2 + $0x578] sm:$0xff]
    %v215 = vld [vmem:[#allocation2 + $0x580] sm:$0xff]
    %v216 = vld [vmem:[#allocation2 + $0x588] sm:$0xff]
    %v217 = vld [vmem:[#allocation2 + $0x590] sm:$0xff]
    %v218 = vld [vmem:[#allocation2 + $0x598] sm:$0xff]
    %v219 = vld [vmem:[#allocation2 + $0x5a0] sm:$0xff]
    %v220 = vld [vmem:[#allocation2 + $0x5a8] sm:$0xff]
    %v221 = vld [vmem:[#allocation2 + $0x5b0] sm:$0xff]
    %v222 = vld [vmem:[#allocation2 + $0x5b8] sm:$0xff]
    %v223 = vld [vmem:[#allocation2 + $0x5c0] sm:$0xff]
    %v224 = vld [vmem:[#allocation2 + $0x5c8] sm:$0xff]
    %v225 = vld [vmem:[#allocation2 + $0x5d0] sm:$0xff]
    %v226 = vld [vmem:[#allocation2 + $0x5d8] sm:$0xff]
    %v227 = vld [vmem:[#allocation2 + $0x5e0] sm:$0xff]
    %v228 = vld [vmem:[#allocation2 + $0x5e8] sm:$0xff]
    %v229 = vld [vmem:[#allocation2 + $0x5f0] sm:$0xff]
    %v230 = vld [vmem:[#allocation2 + $0x5f8] sm:$0xff]
    %v231 = vld [vmem:[%s0] sm:$0xff]
    %v232 = vld [vmem:[%s0 + $0x8] sm:$0xff]
    %v233 = vld [vmem:[%s0 + $0x10] sm:$0xff]
    %v234 = vunpack.c.l.bf16 %v231
    %v235 = vunpack.c.h.bf16 %v231
    %v236 = vunpack.c.l.bf16 %v232
    %v237 = vunpack.c.h.bf16 %v232
    %v238 = vunpack.c.l.bf16 %v233
    %v239 = vunpack.c.h.bf16 %v233
    %s240 = scalar_lea.vmem %s0, 24
    %v241 = vld [vmem:[%s240] sm:$0xff]
    %v242 = vld [vmem:[%s240 + $0x8] sm:$0xff]
    %v243 = vld [vmem:[%s240 + $0x10] sm:$0xff]
    %v244 = vunpack.c.l.bf16 %v241
    %v245 = vunpack.c.h.bf16 %v241
    %v246 = vunpack.c.l.bf16 %v242
    %v247 = vunpack.c.h.bf16 %v242
    %v248 = vunpack.c.l.bf16 %v243
    %v249 = vunpack.c.h.bf16 %v243
    %v250 = vadd.f32 %v234, %v244
    %v251 = vadd.f32 %v235, %v245
    %v252 = vadd.f32 %v236, %v246
    %v253 = vadd.f32 %v237, %v247
    %v254 = vadd.f32 %v238, %v248
    %v255 = vadd.f32 %v239, %v249
    %s256 = scalar_lea.vmem %s0, 48
    %v257 = vld [vmem:[%s256] sm:$0xff]
    %v258 = vld [vmem:[%s256 + $0x8] sm:$0xff]
    %v259 = vld [vmem:[%s256 + $0x10] sm:$0xff]
    %v260 = vunpack.c.l.bf16 %v257
    %v261 = vunpack.c.h.bf16 %v257
    %v262 = vunpack.c.l.bf16 %v258
    %v263 = vunpack.c.h.bf16 %v258
    %v264 = vunpack.c.l.bf16 %v259
    %v265 = vunpack.c.h.bf16 %v259
    %s266 = scalar_lea.vmem %s0, 72
    %v267 = vld [vmem:[%s266] sm:$0xff]
    %v268 = vld [vmem:[%s266 + $0x8] sm:$0xff]
    %v269 = vld [vmem:[%s266 + $0x10] sm:$0xff]
    %v270 = vunpack.c.l.bf16 %v267
    %v271 = vunpack.c.h.bf16 %v267
    %v272 = vunpack.c.l.bf16 %v268
    %v273 = vunpack.c.h.bf16 %v268
    %v274 = vunpack.c.l.bf16 %v269
    %v275 = vunpack.c.h.bf16 %v269
    %v276 = vadd.f32 %v260, %v270
    %v277 = vadd.f32 %v261, %v271
    %v278 = vadd.f32 %v262, %v272
    %v279 = vadd.f32 %v263, %v273
    %v280 = vadd.f32 %v264, %v274
    %v281 = vadd.f32 %v265, %v275
    %v282 = vadd.f32 %v250, %v276
    %v283 = vadd.f32 %v251, %v277
    %v284 = vadd.f32 %v252, %v278
    %v285 = vadd.f32 %v253, %v279
    %v286 = vadd.f32 %v254, %v280
    %v287 = vadd.f32 %v255, %v281
    %v288 = vld [vmem:[%s1] sm:$0xff]
    %v289 = vld [vmem:[%s2] sm:$0x77]
    %v290 = vld [vmem:[%s2 + $0x8] sm:$0x77]
    %292 = vset.pattern.permute.xlu0 0
    %293 = vperm.xlu0 %292, %v288
    %v294 = vpop.permute.xlu0 %293
    %v298 = vperm.slane %v289, 0
    %v299 = vperm.slane %v289, 4
    %v300 = vperm.slane %v290, 0
    %v301 = vperm.slane %v290, 4
    %v306 = vperm.slane %v298, 0
    %v307 = vperm.slane %v299, 0
    %v308 = vperm.slane %v300, 0
    %v309 = vperm.slane %v301, 0
    %v310 = vmul.f32 %v294, %v306
    %v311 = vmul.f32 %v294, %v307
    %v312 = vmul.f32 %v294, %v308
    %v313 = vmul.f32 %v294, %v309
    %314 = vset.pattern.permute.xlu0 1
    %315 = vperm.xlu0 %314, %v288
    %v316 = vpop.permute.xlu0 %315
    %v318 = vperm.slane %v289, 1
    %v319 = vperm.slane %v289, 5
    %v320 = vperm.slane %v290, 1
    %v321 = vperm.slane %v290, 5
    %v326 = vperm.slane %v318, 1
    %v327 = vperm.slane %v319, 1
    %v328 = vperm.slane %v320, 1
    %v329 = vperm.slane %v321, 1
    %v330 = vmul.f32 %v316, %v326
    %v331 = vmul.f32 %v316, %v327
    %v332 = vmul.f32 %v316, %v328
    %v333 = vmul.f32 %v316, %v329
    %v334 = vadd.f32 %v310, %v330
    %v335 = vadd.f32 %v311, %v331
    %v336 = vadd.f32 %v312, %v332
    %v337 = vadd.f32 %v313, %v333
    %338 = vset.pattern.permute.xlu0 2
    %339 = vperm.xlu0 %338, %v288
    %v340 = vpop.permute.xlu0 %339
    %v342 = vperm.slane %v289, 2
    %v343 = vperm.slane %v289, 6
    %v344 = vperm.slane %v290, 2
    %v345 = vperm.slane %v290, 6
    %v350 = vperm.slane %v342, 2
    %v351 = vperm.slane %v343, 2
    %v352 = vperm.slane %v344, 2
    %v353 = vperm.slane %v345, 2
    %v354 = vmul.f32 %v340, %v350
    %v355 = vmul.f32 %v340, %v351
    %v356 = vmul.f32 %v340, %v352
    %v357 = vmul.f32 %v340, %v353
    %v358 = vadd.f32 %v334, %v354
    %v359 = vadd.f32 %v335, %v355
    %v360 = vadd.f32 %v336, %v356
    %v361 = vadd.f32 %v337, %v357
    %v362 = vpack.c.bf16 %v282, %v282
    %v363 = vpack.c.bf16 %v283, %v283
    %v364 = vpack.c.bf16 %v284, %v284
    %v365 = vpack.c.bf16 %v285, %v285
    %v366 = vpack.c.bf16 %v286, %v286
    %v367 = vpack.c.bf16 %v287, %v287
    %v560 = vunpack.c.l.b16 %v39
    %v561 = vunpack.c.h.b16 %v39
    %v562 = vunpack.c.l.b16 %v40
    %v563 = vunpack.c.h.b16 %v40
    %v564 = vunpack.c.l.b16 %v41
    %v565 = vunpack.c.h.b16 %v41
    %v566 = vunpack.c.l.b16 %v42
    %v567 = vunpack.c.h.b16 %v42
    %v568 = vunpack.c.l.b16 %v43
    %v569 = vunpack.c.h.b16 %v43
    %v570 = vunpack.c.l.b16 %v44
    %v571 = vunpack.c.h.b16 %v44
    %v572 = vunpack.c.l.b16 %v45
    %v573 = vunpack.c.h.b16 %v45
    %v574 = vunpack.c.l.b16 %v46
    %v575 = vunpack.c.h.b16 %v46
    %v576 = vunpack.c.l.b16 %v47
    %v577 = vunpack.c.h.b16 %v47
    %v578 = vunpack.c.l.b16 %v48
    %v579 = vunpack.c.h.b16 %v48
    %v580 = vunpack.c.l.b16 %v49
    %v581 = vunpack.c.h.b16 %v49
    %v582 = vunpack.c.l.b16 %v50
    %v583 = vunpack.c.h.b16 %v50
    %v584 = vunpack.c.l.b16 %v51
    %v585 = vunpack.c.h.b16 %v51
    %v586 = vunpack.c.l.b16 %v52
    %v587 = vunpack.c.h.b16 %v52
    %v588 = vunpack.c.l.b16 %v53
    %v589 = vunpack.c.h.b16 %v53
    %v590 = vunpack.c.l.b16 %v54
    %v591 = vunpack.c.h.b16 %v54
    %v592 = vunpack.c.l.b16 %v55
    %v593 = vunpack.c.h.b16 %v55
    %v594 = vunpack.c.l.b16 %v56
    %v595 = vunpack.c.h.b16 %v56
    %v596 = vunpack.c.l.b16 %v57
    %v597 = vunpack.c.h.b16 %v57
    %v598 = vunpack.c.l.b16 %v58
    %v599 = vunpack.c.h.b16 %v58
    %v600 = vunpack.c.l.b16 %v59
    %v601 = vunpack.c.h.b16 %v59
    %v602 = vunpack.c.l.b16 %v60
    %v603 = vunpack.c.h.b16 %v60
    %v604 = vunpack.c.l.b16 %v61
    %v605 = vunpack.c.h.b16 %v61
    %v606 = vunpack.c.l.b16 %v62
    %v607 = vunpack.c.h.b16 %v62
    %v608 = vunpack.c.l.b16 %v63
    %v609 = vunpack.c.h.b16 %v63
    %v610 = vunpack.c.l.b16 %v64
    %v611 = vunpack.c.h.b16 %v64
    %v612 = vunpack.c.l.b16 %v65
    %v613 = vunpack.c.h.b16 %v65
    %v614 = vunpack.c.l.b16 %v66
    %v615 = vunpack.c.h.b16 %v66
    %v616 = vunpack.c.l.b16 %v67
    %v617 = vunpack.c.h.b16 %v67
    %v618 = vunpack.c.l.b16 %v68
    %v619 = vunpack.c.h.b16 %v68
    %v620 = vunpack.c.l.b16 %v69
    %v621 = vunpack.c.h.b16 %v69
    %v622 = vunpack.c.l.b16 %v70
    %v623 = vunpack.c.h.b16 %v70
    %v624 = vunpack.c.l.b16 %v71
    %v625 = vunpack.c.h.b16 %v71
    %v626 = vunpack.c.l.b16 %v72
    %v627 = vunpack.c.h.b16 %v72
    %v628 = vunpack.c.l.b16 %v73
    %v629 = vunpack.c.h.b16 %v73
    %v630 = vunpack.c.l.b16 %v74
    %v631 = vunpack.c.h.b16 %v74
    %v632 = vunpack.c.l.b16 %v75
    %v633 = vunpack.c.h.b16 %v75
    %v634 = vunpack.c.l.b16 %v76
    %v635 = vunpack.c.h.b16 %v76
    %v636 = vunpack.c.l.b16 %v77
    %v637 = vunpack.c.h.b16 %v77
    %v638 = vunpack.c.l.b16 %v78
    %v639 = vunpack.c.h.b16 %v78
    %v640 = vunpack.c.l.b16 %v79
    %v641 = vunpack.c.h.b16 %v79
    %v642 = vunpack.c.l.b16 %v80
    %v643 = vunpack.c.h.b16 %v80
    %v644 = vunpack.c.l.b16 %v81
    %v645 = vunpack.c.h.b16 %v81
    %v646 = vunpack.c.l.b16 %v82
    %v647 = vunpack.c.h.b16 %v82
    %v648 = vunpack.c.l.b16 %v83
    %v649 = vunpack.c.h.b16 %v83
    %v650 = vunpack.c.l.b16 %v84
    %v651 = vunpack.c.h.b16 %v84
    %v652 = vunpack.c.l.b16 %v85
    %v653 = vunpack.c.h.b16 %v85
    %v654 = vunpack.c.l.b16 %v86
    %v655 = vunpack.c.h.b16 %v86
    %v656 = vunpack.c.l.b16 %v87
    %v657 = vunpack.c.h.b16 %v87
    %v658 = vunpack.c.l.b16 %v88
    %v659 = vunpack.c.h.b16 %v88
    %v660 = vunpack.c.l.b16 %v89
    %v661 = vunpack.c.h.b16 %v89
    %v662 = vunpack.c.l.b16 %v90
    %v663 = vunpack.c.h.b16 %v90
    %v664 = vunpack.c.l.b16 %v91
    %v665 = vunpack.c.h.b16 %v91
    %v666 = vunpack.c.l.b16 %v92
    %v667 = vunpack.c.h.b16 %v92
    %v668 = vunpack.c.l.b16 %v93
    %v669 = vunpack.c.h.b16 %v93
    %v670 = vunpack.c.l.b16 %v94
    %v671 = vunpack.c.h.b16 %v94
    %v672 = vunpack.c.l.b16 %v95
    %v673 = vunpack.c.h.b16 %v95
    %v674 = vunpack.c.l.b16 %v96
    %v675 = vunpack.c.h.b16 %v96
    %v676 = vunpack.c.l.b16 %v97
    %v677 = vunpack.c.h.b16 %v97
    %v678 = vunpack.c.l.b16 %v98
    %v679 = vunpack.c.h.b16 %v98
    %v680 = vunpack.c.l.b16 %v99
    %v681 = vunpack.c.h.b16 %v99
    %v682 = vunpack.c.l.b16 %v100
    %v683 = vunpack.c.h.b16 %v100
    %v684 = vunpack.c.l.b16 %v101
    %v685 = vunpack.c.h.b16 %v101
    %v686 = vunpack.c.l.b16 %v102
    %v687 = vunpack.c.h.b16 %v102
    %v688 = vunpack.c.l.b16 %v103
    %v689 = vunpack.c.h.b16 %v103
    %v690 = vunpack.c.l.b16 %v104
    %v691 = vunpack.c.h.b16 %v104
    %v692 = vunpack.c.l.b16 %v105
    %v693 = vunpack.c.h.b16 %v105
    %v694 = vunpack.c.l.b16 %v106
    %v695 = vunpack.c.h.b16 %v106
    %v696 = vunpack.c.l.b16 %v107
    %v697 = vunpack.c.h.b16 %v107
    %v698 = vunpack.c.l.b16 %v108
    %v699 = vunpack.c.h.b16 %v108
    %v700 = vunpack.c.l.b16 %v109
    %v701 = vunpack.c.h.b16 %v109
    %v702 = vunpack.c.l.b16 %v110
    %v703 = vunpack.c.h.b16 %v110
    %v704 = vunpack.c.l.b16 %v111
    %v705 = vunpack.c.h.b16 %v111
    %v706 = vunpack.c.l.b16 %v112
    %v707 = vunpack.c.h.b16 %v112
    %v708 = vunpack.c.l.b16 %v113
    %v709 = vunpack.c.h.b16 %v113
    %v710 = vunpack.c.l.b16 %v114
    %v711 = vunpack.c.h.b16 %v114
    %v712 = vunpack.c.l.b16 %v115
    %v713 = vunpack.c.h.b16 %v115
    %v714 = vunpack.c.l.b16 %v116
    %v715 = vunpack.c.h.b16 %v116
    %v716 = vunpack.c.l.b16 %v117
    %v717 = vunpack.c.h.b16 %v117
    %v718 = vunpack.c.l.b16 %v118
    %v719 = vunpack.c.h.b16 %v118
    %v720 = vunpack.c.l.b16 %v119
    %v721 = vunpack.c.h.b16 %v119
    %v722 = vunpack.c.l.b16 %v120
    %v723 = vunpack.c.h.b16 %v120
    %v724 = vunpack.c.l.b16 %v121
    %v725 = vunpack.c.h.b16 %v121
    %v726 = vunpack.c.l.b16 %v122
    %v727 = vunpack.c.h.b16 %v122
    %v728 = vunpack.c.l.b16 %v123
    %v729 = vunpack.c.h.b16 %v123
    %v730 = vunpack.c.l.b16 %v124
    %v731 = vunpack.c.h.b16 %v124
    %v732 = vunpack.c.l.b16 %v125
    %v733 = vunpack.c.h.b16 %v125
    %v734 = vunpack.c.l.b16 %v126
    %v735 = vunpack.c.h.b16 %v126
    %v736 = vunpack.c.l.b16 %v127
    %v737 = vunpack.c.h.b16 %v127
    %v738 = vunpack.c.l.b16 %v128
    %v739 = vunpack.c.h.b16 %v128
    %v740 = vunpack.c.l.b16 %v129
    %v741 = vunpack.c.h.b16 %v129
    %v742 = vunpack.c.l.b16 %v130
    %v743 = vunpack.c.h.b16 %v130
    %v744 = vunpack.c.l.b16 %v131
    %v745 = vunpack.c.h.b16 %v131
    %v746 = vunpack.c.l.b16 %v132
    %v747 = vunpack.c.h.b16 %v132
    %v748 = vunpack.c.l.b16 %v133
    %v749 = vunpack.c.h.b16 %v133
    %v750 = vunpack.c.l.b16 %v134
    %v751 = vunpack.c.h.b16 %v134
    %v752 = vunpack.c.l.b16 %v135
    %v753 = vunpack.c.h.b16 %v135
    %v754 = vunpack.c.l.b16 %v136
    %v755 = vunpack.c.h.b16 %v136
    %v756 = vunpack.c.l.b16 %v137
    %v757 = vunpack.c.h.b16 %v137
    %v758 = vunpack.c.l.b16 %v138
    %v759 = vunpack.c.h.b16 %v138
    %v760 = vunpack.c.l.b16 %v139
    %v761 = vunpack.c.h.b16 %v139
    %v762 = vunpack.c.l.b16 %v140
    %v763 = vunpack.c.h.b16 %v140
    %v764 = vunpack.c.l.b16 %v141
    %v765 = vunpack.c.h.b16 %v141
    %v766 = vunpack.c.l.b16 %v142
    %v767 = vunpack.c.h.b16 %v142
    %v768 = vunpack.c.l.b16 %v143
    %v769 = vunpack.c.h.b16 %v143
    %v770 = vunpack.c.l.b16 %v144
    %v771 = vunpack.c.h.b16 %v144
    %v772 = vunpack.c.l.b16 %v145
    %v773 = vunpack.c.h.b16 %v145
    %v774 = vunpack.c.l.b16 %v146
    %v775 = vunpack.c.h.b16 %v146
    %v776 = vunpack.c.l.b16 %v147
    %v777 = vunpack.c.h.b16 %v147
    %v778 = vunpack.c.l.b16 %v148
    %v779 = vunpack.c.h.b16 %v148
    %v780 = vunpack.c.l.b16 %v149
    %v781 = vunpack.c.h.b16 %v149
    %v782 = vunpack.c.l.b16 %v150
    %v783 = vunpack.c.h.b16 %v150
    %v784 = vunpack.c.l.b16 %v151
    %v785 = vunpack.c.h.b16 %v151
    %v786 = vunpack.c.l.b16 %v152
    %v787 = vunpack.c.h.b16 %v152
    %v788 = vunpack.c.l.b16 %v153
    %v789 = vunpack.c.h.b16 %v153
    %v790 = vunpack.c.l.b16 %v154
    %v791 = vunpack.c.h.b16 %v154
    %v792 = vunpack.c.l.b16 %v155
    %v793 = vunpack.c.h.b16 %v155
    %v794 = vunpack.c.l.b16 %v156
    %v795 = vunpack.c.h.b16 %v156
    %v796 = vunpack.c.l.b16 %v157
    %v797 = vunpack.c.h.b16 %v157
    %v798 = vunpack.c.l.b16 %v158
    %v799 = vunpack.c.h.b16 %v158
    %v800 = vunpack.c.l.b16 %v159
    %v801 = vunpack.c.h.b16 %v159
    %v802 = vunpack.c.l.b16 %v160
    %v803 = vunpack.c.h.b16 %v160
    %v804 = vunpack.c.l.b16 %v161
    %v805 = vunpack.c.h.b16 %v161
    %v806 = vunpack.c.l.b16 %v162
    %v807 = vunpack.c.h.b16 %v162
    %v808 = vunpack.c.l.b16 %v163
    %v809 = vunpack.c.h.b16 %v163
    %v810 = vunpack.c.l.b16 %v164
    %v811 = vunpack.c.h.b16 %v164
    %v812 = vunpack.c.l.b16 %v165
    %v813 = vunpack.c.h.b16 %v165
    %v814 = vunpack.c.l.b16 %v166
    %v815 = vunpack.c.h.b16 %v166
    %v816 = vunpack.c.l.b16 %v167
    %v817 = vunpack.c.h.b16 %v167
    %v818 = vunpack.c.l.b16 %v168
    %v819 = vunpack.c.h.b16 %v168
    %v820 = vunpack.c.l.b16 %v169
    %v821 = vunpack.c.h.b16 %v169
    %v822 = vunpack.c.l.b16 %v170
    %v823 = vunpack.c.h.b16 %v170
    %v824 = vunpack.c.l.b16 %v171
    %v825 = vunpack.c.h.b16 %v171
    %v826 = vunpack.c.l.b16 %v172
    %v827 = vunpack.c.h.b16 %v172
    %v828 = vunpack.c.l.b16 %v173
    %v829 = vunpack.c.h.b16 %v173
    %v830 = vunpack.c.l.b16 %v174
    %v831 = vunpack.c.h.b16 %v174
    %v832 = vunpack.c.l.b16 %v175
    %v833 = vunpack.c.h.b16 %v175
    %v834 = vunpack.c.l.b16 %v176
    %v835 = vunpack.c.h.b16 %v176
    %v836 = vunpack.c.l.b16 %v177
    %v837 = vunpack.c.h.b16 %v177
    %v838 = vunpack.c.l.b16 %v178
    %v839 = vunpack.c.h.b16 %v178
    %v840 = vunpack.c.l.b16 %v179
    %v841 = vunpack.c.h.b16 %v179
    %v842 = vunpack.c.l.b16 %v180
    %v843 = vunpack.c.h.b16 %v180
    %v844 = vunpack.c.l.b16 %v181
    %v845 = vunpack.c.h.b16 %v181
    %v846 = vunpack.c.l.b16 %v182
    %v847 = vunpack.c.h.b16 %v182
    %v848 = vunpack.c.l.b16 %v183
    %v849 = vunpack.c.h.b16 %v183
    %v850 = vunpack.c.l.b16 %v184
    %v851 = vunpack.c.h.b16 %v184
    %v852 = vunpack.c.l.b16 %v185
    %v853 = vunpack.c.h.b16 %v185
    %v854 = vunpack.c.l.b16 %v186
    %v855 = vunpack.c.h.b16 %v186
    %v856 = vunpack.c.l.b16 %v187
    %v857 = vunpack.c.h.b16 %v187
    %v858 = vunpack.c.l.b16 %v188
    %v859 = vunpack.c.h.b16 %v188
    %v860 = vunpack.c.l.b16 %v189
    %v861 = vunpack.c.h.b16 %v189
    %v862 = vunpack.c.l.b16 %v190
    %v863 = vunpack.c.h.b16 %v190
    %v864 = vunpack.c.l.b16 %v191
    %v865 = vunpack.c.h.b16 %v191
    %v866 = vunpack.c.l.b16 %v192
    %v867 = vunpack.c.h.b16 %v192
    %v868 = vunpack.c.l.b16 %v193
    %v869 = vunpack.c.h.b16 %v193
    %v870 = vunpack.c.l.b16 %v194
    %v871 = vunpack.c.h.b16 %v194
    %v872 = vunpack.c.l.b16 %v195
    %v873 = vunpack.c.h.b16 %v195
    %v874 = vunpack.c.l.b16 %v196
    %v875 = vunpack.c.h.b16 %v196
    %v876 = vunpack.c.l.b16 %v197
    %v877 = vunpack.c.h.b16 %v197
    %v878 = vunpack.c.l.b16 %v198
    %v879 = vunpack.c.h.b16 %v198
    %v880 = vunpack.c.l.b16 %v199
    %v881 = vunpack.c.h.b16 %v199
    %v882 = vunpack.c.l.b16 %v200
    %v883 = vunpack.c.h.b16 %v200
    %v884 = vunpack.c.l.b16 %v201
    %v885 = vunpack.c.h.b16 %v201
    %v886 = vunpack.c.l.b16 %v202
    %v887 = vunpack.c.h.b16 %v202
    %v888 = vunpack.c.l.b16 %v203
    %v889 = vunpack.c.h.b16 %v203
    %v890 = vunpack.c.l.b16 %v204
    %v891 = vunpack.c.h.b16 %v204
    %v892 = vunpack.c.l.b16 %v205
    %v893 = vunpack.c.h.b16 %v205
    %v894 = vunpack.c.l.b16 %v206
    %v895 = vunpack.c.h.b16 %v206
    %v896 = vunpack.c.l.b16 %v207
    %v897 = vunpack.c.h.b16 %v207
    %v898 = vunpack.c.l.b16 %v208
    %v899 = vunpack.c.h.b16 %v208
    %v900 = vunpack.c.l.b16 %v209
    %v901 = vunpack.c.h.b16 %v209
    %v902 = vunpack.c.l.b16 %v210
    %v903 = vunpack.c.h.b16 %v210
    %v904 = vunpack.c.l.b16 %v211
    %v905 = vunpack.c.h.b16 %v211
    %v906 = vunpack.c.l.b16 %v212
    %v907 = vunpack.c.h.b16 %v212
    %v908 = vunpack.c.l.b16 %v213
    %v909 = vunpack.c.h.b16 %v213
    %v910 = vunpack.c.l.b16 %v214
    %v911 = vunpack.c.h.b16 %v214
    %v912 = vunpack.c.l.b16 %v215
    %v913 = vunpack.c.h.b16 %v215
    %v914 = vunpack.c.l.b16 %v216
    %v915 = vunpack.c.h.b16 %v216
    %v916 = vunpack.c.l.b16 %v217
    %v917 = vunpack.c.h.b16 %v217
    %v918 = vunpack.c.l.b16 %v218
    %v919 = vunpack.c.h.b16 %v218
    %v920 = vunpack.c.l.b16 %v219
    %v921 = vunpack.c.h.b16 %v219
    %v922 = vunpack.c.l.b16 %v220
    %v923 = vunpack.c.h.b16 %v220
    %v924 = vunpack.c.l.b16 %v221
    %v925 = vunpack.c.h.b16 %v221
    %v926 = vunpack.c.l.b16 %v222
    %v927 = vunpack.c.h.b16 %v222
    %v928 = vunpack.c.l.b16 %v223
    %v929 = vunpack.c.h.b16 %v223
    %v930 = vunpack.c.l.b16 %v224
    %v931 = vunpack.c.h.b16 %v224
    %v932 = vunpack.c.l.b16 %v225
    %v933 = vunpack.c.h.b16 %v225
    %v934 = vunpack.c.l.b16 %v226
    %v935 = vunpack.c.h.b16 %v226
    %v936 = vunpack.c.l.b16 %v227
    %v937 = vunpack.c.h.b16 %v227
    %v938 = vunpack.c.l.b16 %v228
    %v939 = vunpack.c.h.b16 %v228
    %v940 = vunpack.c.l.b16 %v229
    %v941 = vunpack.c.h.b16 %v229
    %v942 = vunpack.c.l.b16 %v230
    %v943 = vunpack.c.h.b16 %v230
    %v944 = vpack.c.b16 %v564, %v560
    %v945 = vpack.c.b16 %v565, %v561
    %v946 = vpack.c.b16 %v566, %v562
    %v947 = vpack.c.b16 %v567, %v563
    %v948 = vpack.c.b16 %v572, %v568
    %v949 = vpack.c.b16 %v573, %v569
    %v950 = vpack.c.b16 %v574, %v570
    %v951 = vpack.c.b16 %v575, %v571
    %v952 = vpack.c.b16 %v580, %v576
    %v953 = vpack.c.b16 %v581, %v577
    %v954 = vpack.c.b16 %v582, %v578
    %v955 = vpack.c.b16 %v583, %v579
    %v956 = vpack.c.b16 %v588, %v584
    %v957 = vpack.c.b16 %v589, %v585
    %v958 = vpack.c.b16 %v590, %v586
    %v959 = vpack.c.b16 %v591, %v587
    %v960 = vpack.c.b16 %v596, %v592
    %v961 = vpack.c.b16 %v597, %v593
    %v962 = vpack.c.b16 %v598, %v594
    %v963 = vpack.c.b16 %v599, %v595
    %v964 = vpack.c.b16 %v604, %v600
    %v965 = vpack.c.b16 %v605, %v601
    %v966 = vpack.c.b16 %v606, %v602
    %v967 = vpack.c.b16 %v607, %v603
    %v968 = vpack.c.b16 %v612, %v608
    %v969 = vpack.c.b16 %v613, %v609
    %v970 = vpack.c.b16 %v614, %v610
    %v971 = vpack.c.b16 %v615, %v611
    %v972 = vpack.c.b16 %v620, %v616
    %v973 = vpack.c.b16 %v621, %v617
    %v974 = vpack.c.b16 %v622, %v618
    %v975 = vpack.c.b16 %v623, %v619
    %v976 = vpack.c.b16 %v628, %v624
    %v977 = vpack.c.b16 %v629, %v625
    %v978 = vpack.c.b16 %v630, %v626
    %v979 = vpack.c.b16 %v631, %v627
    %v980 = vpack.c.b16 %v636, %v632
    %v981 = vpack.c.b16 %v637, %v633
    %v982 = vpack.c.b16 %v638, %v634
    %v983 = vpack.c.b16 %v639, %v635
    %v984 = vpack.c.b16 %v644, %v640
    %v985 = vpack.c.b16 %v645, %v641
    %v986 = vpack.c.b16 %v646, %v642
    %v987 = vpack.c.b16 %v647, %v643
    %v988 = vpack.c.b16 %v652, %v648
    %v989 = vpack.c.b16 %v653, %v649
    %v990 = vpack.c.b16 %v654, %v650
    %v991 = vpack.c.b16 %v655, %v651
    %v992 = vpack.c.b16 %v660, %v656
    %v993 = vpack.c.b16 %v661, %v657
    %v994 = vpack.c.b16 %v662, %v658
    %v995 = vpack.c.b16 %v663, %v659
    %v996 = vpack.c.b16 %v668, %v664
    %v997 = vpack.c.b16 %v669, %v665
    %v998 = vpack.c.b16 %v670, %v666
    %v999 = vpack.c.b16 %v671, %v667
    %v1000 = vpack.c.b16 %v676, %v672
    %v1001 = vpack.c.b16 %v677, %v673
    %v1002 = vpack.c.b16 %v678, %v674
    %v1003 = vpack.c.b16 %v679, %v675
    %v1004 = vpack.c.b16 %v684, %v680
    %v1005 = vpack.c.b16 %v685, %v681
    %v1006 = vpack.c.b16 %v686, %v682
    %v1007 = vpack.c.b16 %v687, %v683
    %v1008 = vpack.c.b16 %v692, %v688
    %v1009 = vpack.c.b16 %v693, %v689
    %v1010 = vpack.c.b16 %v694, %v690
    %v1011 = vpack.c.b16 %v695, %v691
    %v1012 = vpack.c.b16 %v700, %v696
    %v1013 = vpack.c.b16 %v701, %v697
    %v1014 = vpack.c.b16 %v702, %v698
    %v1015 = vpack.c.b16 %v703, %v699
    %v1016 = vpack.c.b16 %v708, %v704
    %v1017 = vpack.c.b16 %v709, %v705
    %v1018 = vpack.c.b16 %v710, %v706
    %v1019 = vpack.c.b16 %v711, %v707
    %v1020 = vpack.c.b16 %v716, %v712
    %v1021 = vpack.c.b16 %v717, %v713
    %v1022 = vpack.c.b16 %v718, %v714
    %v1023 = vpack.c.b16 %v719, %v715
    %v1024 = vpack.c.b16 %v724, %v720
    %v1025 = vpack.c.b16 %v725, %v721
    %v1026 = vpack.c.b16 %v726, %v722
    %v1027 = vpack.c.b16 %v727, %v723
    %v1028 = vpack.c.b16 %v732, %v728
    %v1029 = vpack.c.b16 %v733, %v729
    %v1030 = vpack.c.b16 %v734, %v730
    %v1031 = vpack.c.b16 %v735, %v731
    %v1032 = vpack.c.b16 %v740, %v736
    %v1033 = vpack.c.b16 %v741, %v737
    %v1034 = vpack.c.b16 %v742, %v738
    %v1035 = vpack.c.b16 %v743, %v739
    %v1036 = vpack.c.b16 %v748, %v744
    %v1037 = vpack.c.b16 %v749, %v745
    %v1038 = vpack.c.b16 %v750, %v746
    %v1039 = vpack.c.b16 %v751, %v747
    %v1040 = vpack.c.b16 %v756, %v752
    %v1041 = vpack.c.b16 %v757, %v753
    %v1042 = vpack.c.b16 %v758, %v754
    %v1043 = vpack.c.b16 %v759, %v755
    %v1044 = vpack.c.b16 %v764, %v760
    %v1045 = vpack.c.b16 %v765, %v761
    %v1046 = vpack.c.b16 %v766, %v762
    %v1047 = vpack.c.b16 %v767, %v763
    %v1048 = vpack.c.b16 %v772, %v768
    %v1049 = vpack.c.b16 %v773, %v769
    %v1050 = vpack.c.b16 %v774, %v770
    %v1051 = vpack.c.b16 %v775, %v771
    %v1052 = vpack.c.b16 %v780, %v776
    %v1053 = vpack.c.b16 %v781, %v777
    %v1054 = vpack.c.b16 %v782, %v778
    %v1055 = vpack.c.b16 %v783, %v779
    %v1056 = vpack.c.b16 %v788, %v784
    %v1057 = vpack.c.b16 %v789, %v785
    %v1058 = vpack.c.b16 %v790, %v786
    %v1059 = vpack.c.b16 %v791, %v787
    %v1060 = vpack.c.b16 %v796, %v792
    %v1061 = vpack.c.b16 %v797, %v793
    %v1062 = vpack.c.b16 %v798, %v794
    %v1063 = vpack.c.b16 %v799, %v795
    %v1064 = vpack.c.b16 %v804, %v800
    %v1065 = vpack.c.b16 %v805, %v801
    %v1066 = vpack.c.b16 %v806, %v802
    %v1067 = vpack.c.b16 %v807, %v803
    %v1068 = vpack.c.b16 %v812, %v808
    %v1069 = vpack.c.b16 %v813, %v809
    %v1070 = vpack.c.b16 %v814, %v810
    %v1071 = vpack.c.b16 %v815, %v811
    %v1072 = vpack.c.b16 %v820, %v816
    %v1073 = vpack.c.b16 %v821, %v817
    %v1074 = vpack.c.b16 %v822, %v818
    %v1075 = vpack.c.b16 %v823, %v819
    %v1076 = vpack.c.b16 %v828, %v824
    %v1077 = vpack.c.b16 %v829, %v825
    %v1078 = vpack.c.b16 %v830, %v826
    %v1079 = vpack.c.b16 %v831, %v827
    %v1080 = vpack.c.b16 %v836, %v832
    %v1081 = vpack.c.b16 %v837, %v833
    %v1082 = vpack.c.b16 %v838, %v834
    %v1083 = vpack.c.b16 %v839, %v835
    %v1084 = vpack.c.b16 %v844, %v840
    %v1085 = vpack.c.b16 %v845, %v841
    %v1086 = vpack.c.b16 %v846, %v842
    %v1087 = vpack.c.b16 %v847, %v843
    %v1088 = vpack.c.b16 %v852, %v848
    %v1089 = vpack.c.b16 %v853, %v849
    %v1090 = vpack.c.b16 %v854, %v850
    %v1091 = vpack.c.b16 %v855, %v851
    %v1092 = vpack.c.b16 %v860, %v856
    %v1093 = vpack.c.b16 %v861, %v857
    %v1094 = vpack.c.b16 %v862, %v858
    %v1095 = vpack.c.b16 %v863, %v859
    %v1096 = vpack.c.b16 %v868, %v864
    %v1097 = vpack.c.b16 %v869, %v865
    %v1098 = vpack.c.b16 %v870, %v866
    %v1099 = vpack.c.b16 %v871, %v867
    %v1100 = vpack.c.b16 %v876, %v872
    %v1101 = vpack.c.b16 %v877, %v873
    %v1102 = vpack.c.b16 %v878, %v874
    %v1103 = vpack.c.b16 %v879, %v875
    %v1104 = vpack.c.b16 %v884, %v880
    %v1105 = vpack.c.b16 %v885, %v881
    %v1106 = vpack.c.b16 %v886, %v882
    %v1107 = vpack.c.b16 %v887, %v883
    %v1108 = vpack.c.b16 %v892, %v888
    %v1109 = vpack.c.b16 %v893, %v889
    %v1110 = vpack.c.b16 %v894, %v890
    %v1111 = vpack.c.b16 %v895, %v891
    %v1112 = vpack.c.b16 %v900, %v896
    %v1113 = vpack.c.b16 %v901, %v897
    %v1114 = vpack.c.b16 %v902, %v898
    %v1115 = vpack.c.b16 %v903, %v899
    %v1116 = vpack.c.b16 %v908, %v904
    %v1117 = vpack.c.b16 %v909, %v905
    %v1118 = vpack.c.b16 %v910, %v906
    %v1119 = vpack.c.b16 %v911, %v907
    %v1120 = vpack.c.b16 %v916, %v912
    %v1121 = vpack.c.b16 %v917, %v913
    %v1122 = vpack.c.b16 %v918, %v914
    %v1123 = vpack.c.b16 %v919, %v915
    %v1124 = vpack.c.b16 %v924, %v920
    %v1125 = vpack.c.b16 %v925, %v921
    %v1126 = vpack.c.b16 %v926, %v922
    %v1127 = vpack.c.b16 %v927, %v923
    %v1128 = vpack.c.b16 %v932, %v928
    %v1129 = vpack.c.b16 %v933, %v929
    %v1130 = vpack.c.b16 %v934, %v930
    %v1131 = vpack.c.b16 %v935, %v931
    %v1132 = vpack.c.b16 %v940, %v936
    %v1133 = vpack.c.b16 %v941, %v937
    %v1134 = vpack.c.b16 %v942, %v938
    %v1135 = vpack.c.b16 %v943, %v939
    %1328 = vmatpush.bf16.msra.mxu0 %v972
    %1329 = vmatpush.bf16.msra.mxu0 %v968
    %1330 = vmatpush.bf16.msra.mxu0 %v964
    %1331 = vmatpush.bf16.msra.mxu0 %v960
    %1332 = vmatpush.bf16.msra.mxu0 %v956
    %1333 = vmatpush.bf16.msra.mxu0 %v952
    %1334 = vmatpush.bf16.msra.mxu0 %v948
    %1335 = vmatpush.bf16.msra.mxu0 %v944
    %1336 = vmatmul.bf16.gmra.mxu0 %v362
    %v1337 = vpop.f32.mrf.mxu0
    %v1338 = vadd.f32 0.0, %v1337
    %v1339 = vpop.f32.mrf.mxu0
    %1340 = vdwg.mxu0
    %1341 = vmatpush.bf16.msra.mxu0 %v1004
    %1342 = vmatpush.bf16.msra.mxu0 %v1000
    %1343 = vmatpush.bf16.msra.mxu0 %v996
    %1344 = vmatpush.bf16.msra.mxu0 %v992
    %1345 = vmatpush.bf16.msra.mxu0 %v988
    %1346 = vmatpush.bf16.msra.mxu0 %v984
    %1347 = vmatpush.bf16.msra.mxu0 %v980
    %1348 = vmatpush.bf16.msra.mxu0 %v976
    %1349 = vmatmul.bf16.gmra.mxu0 %v363
    %v1350 = vpop.f32.mrf.mxu0
    %v1351 = vadd.f32 %v1338, %v1350
    %v1352 = vpop.f32.mrf.mxu0
    %1353 = vdwg.mxu0
    %1354 = vmatpush.bf16.msra.mxu0 %v1036
    %1355 = vmatpush.bf16.msra.mxu0 %v1032
    %1356 = vmatpush.bf16.msra.mxu0 %v1028
    %1357 = vmatpush.bf16.msra.mxu0 %v1024
    %1358 = vmatpush.bf16.msra.mxu0 %v1020
    %1359 = vmatpush.bf16.msra.mxu0 %v1016
    %1360 = vmatpush.bf16.msra.mxu0 %v1012
    %1361 = vmatpush.bf16.msra.mxu0 %v1008
    %1362 = vmatmul.bf16.gmra.mxu0 %v364
    %v1363 = vpop.f32.mrf.mxu0
    %v1364 = vadd.f32 %v1351, %v1363
    %v1365 = vpop.f32.mrf.mxu0
    %1366 = vdwg.mxu0
    %1367 = vmatpush.bf16.msra.mxu0 %v1068
    %1368 = vmatpush.bf16.msra.mxu0 %v1064
    %1369 = vmatpush.bf16.msra.mxu0 %v1060
    %1370 = vmatpush.bf16.msra.mxu0 %v1056
    %1371 = vmatpush.bf16.msra.mxu0 %v1052
    %1372 = vmatpush.bf16.msra.mxu0 %v1048
    %1373 = vmatpush.bf16.msra.mxu0 %v1044
    %1374 = vmatpush.bf16.msra.mxu0 %v1040
    %1375 = vmatmul.bf16.gmra.mxu0 %v365
    %v1376 = vpop.f32.mrf.mxu0
    %v1377 = vadd.f32 %v1364, %v1376
    %v1378 = vpop.f32.mrf.mxu0
    %1379 = vdwg.mxu0
    %1380 = vmatpush.bf16.msra.mxu0 %v1100
    %1381 = vmatpush.bf16.msra.mxu0 %v1096
    %1382 = vmatpush.bf16.msra.mxu0 %v1092
    %1383 = vmatpush.bf16.msra.mxu0 %v1088
    %1384 = vmatpush.bf16.msra.mxu0 %v1084
    %1385 = vmatpush.bf16.msra.mxu0 %v1080
    %1386 = vmatpush.bf16.msra.mxu0 %v1076
    %1387 = vmatpush.bf16.msra.mxu0 %v1072
    %1388 = vmatmul.bf16.gmra.mxu0 %v366
    %v1389 = vpop.f32.mrf.mxu0
    %v1390 = vadd.f32 %v1377, %v1389
    %v1391 = vpop.f32.mrf.mxu0
    %1392 = vdwg.mxu0
    %1393 = vmatpush.bf16.msra.mxu0 %v1132
    %1394 = vmatpush.bf16.msra.mxu0 %v1128
    %1395 = vmatpush.bf16.msra.mxu0 %v1124
    %1396 = vmatpush.bf16.msra.mxu0 %v1120
    %1397 = vmatpush.bf16.msra.mxu0 %v1116
    %1398 = vmatpush.bf16.msra.mxu0 %v1112
    %1399 = vmatpush.bf16.msra.mxu0 %v1108
    %1400 = vmatpush.bf16.msra.mxu0 %v1104
    %1401 = vmatmul.bf16.gmra.mxu0 %v367
    %v1402 = vpop.f32.mrf.mxu0
    %v1403 = vadd.f32 %v1390, %v1402
    %v1404 = vpop.f32.mrf.mxu0
    %1405 = vdwg.mxu0
    %1406 = vmatpush.bf16.msra.mxu0 %v973
    %1407 = vmatpush.bf16.msra.mxu0 %v969
    %1408 = vmatpush.bf16.msra.mxu0 %v965
    %1409 = vmatpush.bf16.msra.mxu0 %v961
    %1410 = vmatpush.bf16.msra.mxu0 %v957
    %1411 = vmatpush.bf16.msra.mxu0 %v953
    %1412 = vmatpush.bf16.msra.mxu0 %v949
    %1413 = vmatpush.bf16.msra.mxu0 %v945
    %1414 = vmatmul.bf16.gmra.mxu0 %v362
    %v1415 = vpop.f32.mrf.mxu0
    %v1416 = vadd.f32 0.0, %v1415
    %v1417 = vpop.f32.mrf.mxu0
    %1418 = vdwg.mxu0
    %1419 = vmatpush.bf16.msra.mxu0 %v1005
    %1420 = vmatpush.bf16.msra.mxu0 %v1001
    %1421 = vmatpush.bf16.msra.mxu0 %v997
    %1422 = vmatpush.bf16.msra.mxu0 %v993
    %1423 = vmatpush.bf16.msra.mxu0 %v989
    %1424 = vmatpush.bf16.msra.mxu0 %v985
    %1425 = vmatpush.bf16.msra.mxu0 %v981
    %1426 = vmatpush.bf16.msra.mxu0 %v977
    %1427 = vmatmul.bf16.gmra.mxu0 %v363
    %v1428 = vpop.f32.mrf.mxu0
    %v1429 = vadd.f32 %v1416, %v1428
    %v1430 = vpop.f32.mrf.mxu0
    %1431 = vdwg.mxu0
    %1432 = vmatpush.bf16.msra.mxu0 %v1037
    %1433 = vmatpush.bf16.msra.mxu0 %v1033
    %1434 = vmatpush.bf16.msra.mxu0 %v1029
    %1435 = vmatpush.bf16.msra.mxu0 %v1025
    %1436 = vmatpush.bf16.msra.mxu0 %v1021
    %1437 = vmatpush.bf16.msra.mxu0 %v1017
    %1438 = vmatpush.bf16.msra.mxu0 %v1013
    %1439 = vmatpush.bf16.msra.mxu0 %v1009
    %1440 = vmatmul.bf16.gmra.mxu0 %v364
    %v1441 = vpop.f32.mrf.mxu0
    %v1442 = vadd.f32 %v1429, %v1441
    %v1443 = vpop.f32.mrf.mxu0
    %1444 = vdwg.mxu0
    %1445 = vmatpush.bf16.msra.mxu0 %v1069
    %1446 = vmatpush.bf16.msra.mxu0 %v1065
    %1447 = vmatpush.bf16.msra.mxu0 %v1061
    %1448 = vmatpush.bf16.msra.mxu0 %v1057
    %1449 = vmatpush.bf16.msra.mxu0 %v1053
    %1450 = vmatpush.bf16.msra.mxu0 %v1049
    %1451 = vmatpush.bf16.msra.mxu0 %v1045
    %1452 = vmatpush.bf16.msra.mxu0 %v1041
    %1453 = vmatmul.bf16.gmra.mxu0 %v365
    %v1454 = vpop.f32.mrf.mxu0
    %v1455 = vadd.f32 %v1442, %v1454
    %v1456 = vpop.f32.mrf.mxu0
    %1457 = vdwg.mxu0
    %1458 = vmatpush.bf16.msra.mxu0 %v1101
    %1459 = vmatpush.bf16.msra.mxu0 %v1097
    %1460 = vmatpush.bf16.msra.mxu0 %v1093
    %1461 = vmatpush.bf16.msra.mxu0 %v1089
    %1462 = vmatpush.bf16.msra.mxu0 %v1085
    %1463 = vmatpush.bf16.msra.mxu0 %v1081
    %1464 = vmatpush.bf16.msra.mxu0 %v1077
    %1465 = vmatpush.bf16.msra.mxu0 %v1073
    %1466 = vmatmul.bf16.gmra.mxu0 %v366
    %v1467 = vpop.f32.mrf.mxu0
    %v1468 = vadd.f32 %v1455, %v1467
    %v1469 = vpop.f32.mrf.mxu0
    %1470 = vdwg.mxu0
    %1471 = vmatpush.bf16.msra.mxu0 %v1133
    %1472 = vmatpush.bf16.msra.mxu0 %v1129
    %1473 = vmatpush.bf16.msra.mxu0 %v1125
    %1474 = vmatpush.bf16.msra.mxu0 %v1121
    %1475 = vmatpush.bf16.msra.mxu0 %v1117
    %1476 = vmatpush.bf16.msra.mxu0 %v1113
    %1477 = vmatpush.bf16.msra.mxu0 %v1109
    %1478 = vmatpush.bf16.msra.mxu0 %v1105
    %1479 = vmatmul.bf16.gmra.mxu0 %v367
    %v1480 = vpop.f32.mrf.mxu0
    %v1481 = vadd.f32 %v1468, %v1480
    %v1482 = vpop.f32.mrf.mxu0
    %1483 = vdwg.mxu0
    %1484 = vmatpush.bf16.msra.mxu0 %v974
    %1485 = vmatpush.bf16.msra.mxu0 %v970
    %1486 = vmatpush.bf16.msra.mxu0 %v966
    %1487 = vmatpush.bf16.msra.mxu0 %v962
    %1488 = vmatpush.bf16.msra.mxu0 %v958
    %1489 = vmatpush.bf16.msra.mxu0 %v954
    %1490 = vmatpush.bf16.msra.mxu0 %v950
    %1491 = vmatpush.bf16.msra.mxu0 %v946
    %1492 = vmatmul.bf16.gmra.mxu0 %v362
    %v1493 = vpop.f32.mrf.mxu0
    %v1494 = vadd.f32 0.0, %v1493
    %v1495 = vpop.f32.mrf.mxu0
    %1496 = vdwg.mxu0
    %1497 = vmatpush.bf16.msra.mxu0 %v1006
    %1498 = vmatpush.bf16.msra.mxu0 %v1002
    %1499 = vmatpush.bf16.msra.mxu0 %v998
    %1500 = vmatpush.bf16.msra.mxu0 %v994
    %1501 = vmatpush.bf16.msra.mxu0 %v990
    %1502 = vmatpush.bf16.msra.mxu0 %v986
    %1503 = vmatpush.bf16.msra.mxu0 %v982
    %1504 = vmatpush.bf16.msra.mxu0 %v978
    %1505 = vmatmul.bf16.gmra.mxu0 %v363
    %v1506 = vpop.f32.mrf.mxu0
    %v1507 = vadd.f32 %v1494, %v1506
    %v1508 = vpop.f32.mrf.mxu0
    %1509 = vdwg.mxu0
    %1510 = vmatpush.bf16.msra.mxu0 %v1038
    %1511 = vmatpush.bf16.msra.mxu0 %v1034
    %1512 = vmatpush.bf16.msra.mxu0 %v1030
    %1513 = vmatpush.bf16.msra.mxu0 %v1026
    %1514 = vmatpush.bf16.msra.mxu0 %v1022
    %1515 = vmatpush.bf16.msra.mxu0 %v1018
    %1516 = vmatpush.bf16.msra.mxu0 %v1014
    %1517 = vmatpush.bf16.msra.mxu0 %v1010
    %1518 = vmatmul.bf16.gmra.mxu0 %v364
    %v1519 = vpop.f32.mrf.mxu0
    %v1520 = vadd.f32 %v1507, %v1519
    %v1521 = vpop.f32.mrf.mxu0
    %1522 = vdwg.mxu0
    %1523 = vmatpush.bf16.msra.mxu0 %v1070
    %1524 = vmatpush.bf16.msra.mxu0 %v1066
    %1525 = vmatpush.bf16.msra.mxu0 %v1062
    %1526 = vmatpush.bf16.msra.mxu0 %v1058
    %1527 = vmatpush.bf16.msra.mxu0 %v1054
    %1528 = vmatpush.bf16.msra.mxu0 %v1050
    %1529 = vmatpush.bf16.msra.mxu0 %v1046
    %1530 = vmatpush.bf16.msra.mxu0 %v1042
    %1531 = vmatmul.bf16.gmra.mxu0 %v365
    %v1532 = vpop.f32.mrf.mxu0
    %v1533 = vadd.f32 %v1520, %v1532
    %v1534 = vpop.f32.mrf.mxu0
    %1535 = vdwg.mxu0
    %1536 = vmatpush.bf16.msra.mxu0 %v1102
    %1537 = vmatpush.bf16.msra.mxu0 %v1098
    %1538 = vmatpush.bf16.msra.mxu0 %v1094
    %1539 = vmatpush.bf16.msra.mxu0 %v1090
    %1540 = vmatpush.bf16.msra.mxu0 %v1086
    %1541 = vmatpush.bf16.msra.mxu0 %v1082
    %1542 = vmatpush.bf16.msra.mxu0 %v1078
    %1543 = vmatpush.bf16.msra.mxu0 %v1074
    %1544 = vmatmul.bf16.gmra.mxu0 %v366
    %v1545 = vpop.f32.mrf.mxu0
    %v1546 = vadd.f32 %v1533, %v1545
    %v1547 = vpop.f32.mrf.mxu0
    %1548 = vdwg.mxu0
    %1549 = vmatpush.bf16.msra.mxu0 %v1134
    %1550 = vmatpush.bf16.msra.mxu0 %v1130
    %1551 = vmatpush.bf16.msra.mxu0 %v1126
    %1552 = vmatpush.bf16.msra.mxu0 %v1122
    %1553 = vmatpush.bf16.msra.mxu0 %v1118
    %1554 = vmatpush.bf16.msra.mxu0 %v1114
    %1555 = vmatpush.bf16.msra.mxu0 %v1110
    %1556 = vmatpush.bf16.msra.mxu0 %v1106
    %1557 = vmatmul.bf16.gmra.mxu0 %v367
    %v1558 = vpop.f32.mrf.mxu0
    %v1559 = vadd.f32 %v1546, %v1558
    %v1560 = vpop.f32.mrf.mxu0
    %1561 = vdwg.mxu0
    %1562 = vmatpush.bf16.msra.mxu0 %v975
    %1563 = vmatpush.bf16.msra.mxu0 %v971
    %1564 = vmatpush.bf16.msra.mxu0 %v967
    %1565 = vmatpush.bf16.msra.mxu0 %v963
    %1566 = vmatpush.bf16.msra.mxu0 %v959
    %1567 = vmatpush.bf16.msra.mxu0 %v955
    %1568 = vmatpush.bf16.msra.mxu0 %v951
    %1569 = vmatpush.bf16.msra.mxu0 %v947
    %1570 = vmatmul.bf16.gmra.mxu0 %v362
    %v1571 = vpop.f32.mrf.mxu0
    %v1572 = vadd.f32 0.0, %v1571
    %v1573 = vpop.f32.mrf.mxu0
    %1574 = vdwg.mxu0
    %1575 = vmatpush.bf16.msra.mxu0 %v1007
    %1576 = vmatpush.bf16.msra.mxu0 %v1003
    %1577 = vmatpush.bf16.msra.mxu0 %v999
    %1578 = vmatpush.bf16.msra.mxu0 %v995
    %1579 = vmatpush.bf16.msra.mxu0 %v991
    %1580 = vmatpush.bf16.msra.mxu0 %v987
    %1581 = vmatpush.bf16.msra.mxu0 %v983
    %1582 = vmatpush.bf16.msra.mxu0 %v979
    %1583 = vmatmul.bf16.gmra.mxu0 %v363
    %v1584 = vpop.f32.mrf.mxu0
    %v1585 = vadd.f32 %v1572, %v1584
    %v1586 = vpop.f32.mrf.mxu0
    %1587 = vdwg.mxu0
    %1588 = vmatpush.bf16.msra.mxu0 %v1039
    %1589 = vmatpush.bf16.msra.mxu0 %v1035
    %1590 = vmatpush.bf16.msra.mxu0 %v1031
    %1591 = vmatpush.bf16.msra.mxu0 %v1027
    %1592 = vmatpush.bf16.msra.mxu0 %v1023
    %1593 = vmatpush.bf16.msra.mxu0 %v1019
    %1594 = vmatpush.bf16.msra.mxu0 %v1015
    %1595 = vmatpush.bf16.msra.mxu0 %v1011
    %1596 = vmatmul.bf16.gmra.mxu0 %v364
    %v1597 = vpop.f32.mrf.mxu0
    %v1598 = vadd.f32 %v1585, %v1597
    %v1599 = vpop.f32.mrf.mxu0
    %1600 = vdwg.mxu0
    %1601 = vmatpush.bf16.msra.mxu0 %v1071
    %1602 = vmatpush.bf16.msra.mxu0 %v1067
    %1603 = vmatpush.bf16.msra.mxu0 %v1063
    %1604 = vmatpush.bf16.msra.mxu0 %v1059
    %1605 = vmatpush.bf16.msra.mxu0 %v1055
    %1606 = vmatpush.bf16.msra.mxu0 %v1051
    %1607 = vmatpush.bf16.msra.mxu0 %v1047
    %1608 = vmatpush.bf16.msra.mxu0 %v1043
    %1609 = vmatmul.bf16.gmra.mxu0 %v365
    %v1610 = vpop.f32.mrf.mxu0
    %v1611 = vadd.f32 %v1598, %v1610
    %v1612 = vpop.f32.mrf.mxu0
    %1613 = vdwg.mxu0
    %1614 = vmatpush.bf16.msra.mxu0 %v1103
    %1615 = vmatpush.bf16.msra.mxu0 %v1099
    %1616 = vmatpush.bf16.msra.mxu0 %v1095
    %1617 = vmatpush.bf16.msra.mxu0 %v1091
    %1618 = vmatpush.bf16.msra.mxu0 %v1087
    %1619 = vmatpush.bf16.msra.mxu0 %v1083
    %1620 = vmatpush.bf16.msra.mxu0 %v1079
    %1621 = vmatpush.bf16.msra.mxu0 %v1075
    %1622 = vmatmul.bf16.gmra.mxu0 %v366
    %v1623 = vpop.f32.mrf.mxu0
    %v1624 = vadd.f32 %v1611, %v1623
    %v1625 = vpop.f32.mrf.mxu0
    %1626 = vdwg.mxu0
    %1627 = vmatpush.bf16.msra.mxu0 %v1135
    %1628 = vmatpush.bf16.msra.mxu0 %v1131
    %1629 = vmatpush.bf16.msra.mxu0 %v1127
    %1630 = vmatpush.bf16.msra.mxu0 %v1123
    %1631 = vmatpush.bf16.msra.mxu0 %v1119
    %1632 = vmatpush.bf16.msra.mxu0 %v1115
    %1633 = vmatpush.bf16.msra.mxu0 %v1111
    %1634 = vmatpush.bf16.msra.mxu0 %v1107
    %1635 = vmatmul.bf16.gmra.mxu0 %v367
    %v1636 = vpop.f32.mrf.mxu0
    %v1637 = vadd.f32 %v1624, %v1636
    %v1638 = vpop.f32.mrf.mxu0
    %1639 = vdwg.mxu0
    %v1640 = vadd.f32 %v358, %v1403
    %v1641 = vadd.f32 %v359, %v1481
    %v1642 = vadd.f32 %v360, %v1559
    %v1643 = vadd.f32 %v361, %v1637
    %v1644 = vmax.f32 %v1640, 0.0
    %v1645 = vmax.f32 %v1641, 0.0
    %v1646 = vmax.f32 %v1642, 0.0
    %v1647 = vmax.f32 %v1643, 0.0
    %v1648 = vpack.c.bf16 %v1644, %v1644
    %v1649 = vpack.c.bf16 %v1645, %v1645
    %v1650 = vpack.c.bf16 %v1646, %v1646
    %v1651 = vpack.c.bf16 %v1647, %v1647
    %v1652 = vld [vmem:[%s4] sm:$0xf]
    %v1653 = vld [vmem:[%s4 + $0x4] sm:$0xf]
    %v1654 = vld [vmem:[%s4 + $0x8] sm:$0xf]
    %v1655 = vld [vmem:[%s4 + $0xc] sm:$0xf]
    %v1656 = vld [vmem:[%s4 + $0x10] sm:$0xf]
    %v1657 = vld [vmem:[%s4 + $0x14] sm:$0xf]
    %v1658 = vld [vmem:[%s4 + $0x18] sm:$0xf]
    %v1659 = vld [vmem:[%s4 + $0x1c] sm:$0xf]
    %v1660 = vld [vmem:[%s4 + $0x20] sm:$0xf]
    %v1661 = vld [vmem:[%s4 + $0x24] sm:$0xf]
    %v1662 = vld [vmem:[%s4 + $0x28] sm:$0xf]
    %v1663 = vld [vmem:[%s4 + $0x2c] sm:$0xf]
    %v1664 = vld [vmem:[%s4 + $0x30] sm:$0xf]
    %v1665 = vld [vmem:[%s4 + $0x34] sm:$0xf]
    %v1666 = vld [vmem:[%s4 + $0x38] sm:$0xf]
    %v1667 = vld [vmem:[%s4 + $0x3c] sm:$0xf]
    %v1668 = vld [vmem:[%s4 + $0x40] sm:$0xf]
    %v1669 = vld [vmem:[%s4 + $0x44] sm:$0xf]
    %v1670 = vld [vmem:[%s4 + $0x48] sm:$0xf]
    %v1671 = vld [vmem:[%s4 + $0x4c] sm:$0xf]
    %v1672 = vld [vmem:[%s4 + $0x50] sm:$0xf]
    %v1673 = vld [vmem:[%s4 + $0x54] sm:$0xf]
    %v1674 = vld [vmem:[%s4 + $0x58] sm:$0xf]
    %v1675 = vld [vmem:[%s4 + $0x5c] sm:$0xf]
    %v1676 = vld [vmem:[%s4 + $0x60] sm:$0xf]
    %v1677 = vld [vmem:[%s4 + $0x64] sm:$0xf]
    %v1678 = vld [vmem:[%s4 + $0x68] sm:$0xf]
    %v1679 = vld [vmem:[%s4 + $0x6c] sm:$0xf]
    %v1680 = vld [vmem:[%s4 + $0x70] sm:$0xf]
    %v1681 = vld [vmem:[%s4 + $0x74] sm:$0xf]
    %v1682 = vld [vmem:[%s4 + $0x78] sm:$0xf]
    %v1683 = vld [vmem:[%s4 + $0x7c] sm:$0xf]
    %v1684 = vld [vmem:[%s4 + $0x80] sm:$0xf]
    %v1685 = vld [vmem:[%s4 + $0x84] sm:$0xf]
    %v1686 = vld [vmem:[%s4 + $0x88] sm:$0xf]
    %v1687 = vld [vmem:[%s4 + $0x8c] sm:$0xf]
    %v1688 = vld [vmem:[%s4 + $0x90] sm:$0xf]
    %v1689 = vld [vmem:[%s4 + $0x94] sm:$0xf]
    %v1690 = vld [vmem:[%s4 + $0x98] sm:$0xf]
    %v1691 = vld [vmem:[%s4 + $0x9c] sm:$0xf]
    %v1692 = vld [vmem:[%s4 + $0xa0] sm:$0xf]
    %v1693 = vld [vmem:[%s4 + $0xa4] sm:$0xf]
    %v1694 = vld [vmem:[%s4 + $0xa8] sm:$0xf]
    %v1695 = vld [vmem:[%s4 + $0xac] sm:$0xf]
    %v1696 = vld [vmem:[%s4 + $0xb0] sm:$0xf]
    %v1697 = vld [vmem:[%s4 + $0xb4] sm:$0xf]
    %v1698 = vld [vmem:[%s4 + $0xb8] sm:$0xf]
    %v1699 = vld [vmem:[%s4 + $0xbc] sm:$0xf]
    %v1700 = vld [vmem:[%s4 + $0xc0] sm:$0xf]
    %v1701 = vld [vmem:[%s4 + $0xc4] sm:$0xf]
    %v1702 = vld [vmem:[%s4 + $0xc8] sm:$0xf]
    %v1703 = vld [vmem:[%s4 + $0xcc] sm:$0xf]
    %v1704 = vld [vmem:[%s4 + $0xd0] sm:$0xf]
    %v1705 = vld [vmem:[%s4 + $0xd4] sm:$0xf]
    %v1706 = vld [vmem:[%s4 + $0xd8] sm:$0xf]
    %v1707 = vld [vmem:[%s4 + $0xdc] sm:$0xf]
    %v1708 = vld [vmem:[%s4 + $0xe0] sm:$0xf]
    %v1709 = vld [vmem:[%s4 + $0xe4] sm:$0xf]
    %v1710 = vld [vmem:[%s4 + $0xe8] sm:$0xf]
    %v1711 = vld [vmem:[%s4 + $0xec] sm:$0xf]
    %v1712 = vld [vmem:[%s4 + $0xf0] sm:$0xf]
    %v1713 = vld [vmem:[%s4 + $0xf4] sm:$0xf]
    %v1714 = vld [vmem:[%s4 + $0xf8] sm:$0xf]
    %v1715 = vld [vmem:[%s4 + $0xfc] sm:$0xf]
    %v1716 = vld [vmem:[%s5] sm:$0x1]
    %v1718 = vperm.slane %v1716, 0
    %v1784 = vunpack.c.l.b16 %v1652
    %v1785 = vunpack.c.l.b16 %v1653
    %v1786 = vunpack.c.l.b16 %v1654
    %v1787 = vunpack.c.l.b16 %v1655
    %v1788 = vunpack.c.l.b16 %v1656
    %v1789 = vunpack.c.l.b16 %v1657
    %v1790 = vunpack.c.l.b16 %v1658
    %v1791 = vunpack.c.l.b16 %v1659
    %v1792 = vunpack.c.l.b16 %v1660
    %v1793 = vunpack.c.l.b16 %v1661
    %v1794 = vunpack.c.l.b16 %v1662
    %v1795 = vunpack.c.l.b16 %v1663
    %v1796 = vunpack.c.l.b16 %v1664
    %v1797 = vunpack.c.l.b16 %v1665
    %v1798 = vunpack.c.l.b16 %v1666
    %v1799 = vunpack.c.l.b16 %v1667
    %v1800 = vunpack.c.l.b16 %v1668
    %v1801 = vunpack.c.l.b16 %v1669
    %v1802 = vunpack.c.l.b16 %v1670
    %v1803 = vunpack.c.l.b16 %v1671
    %v1804 = vunpack.c.l.b16 %v1672
    %v1805 = vunpack.c.l.b16 %v1673
    %v1806 = vunpack.c.l.b16 %v1674
    %v1807 = vunpack.c.l.b16 %v1675
    %v1808 = vunpack.c.l.b16 %v1676
    %v1809 = vunpack.c.l.b16 %v1677
    %v1810 = vunpack.c.l.b16 %v1678
    %v1811 = vunpack.c.l.b16 %v1679
    %v1812 = vunpack.c.l.b16 %v1680
    %v1813 = vunpack.c.l.b16 %v1681
    %v1814 = vunpack.c.l.b16 %v1682
    %v1815 = vunpack.c.l.b16 %v1683
    %v1816 = vunpack.c.l.b16 %v1684
    %v1817 = vunpack.c.l.b16 %v1685
    %v1818 = vunpack.c.l.b16 %v1686
    %v1819 = vunpack.c.l.b16 %v1687
    %v1820 = vunpack.c.l.b16 %v1688
    %v1821 = vunpack.c.l.b16 %v1689
    %v1822 = vunpack.c.l.b16 %v1690
    %v1823 = vunpack.c.l.b16 %v1691
    %v1824 = vunpack.c.l.b16 %v1692
    %v1825 = vunpack.c.l.b16 %v1693
    %v1826 = vunpack.c.l.b16 %v1694
    %v1827 = vunpack.c.l.b16 %v1695
    %v1828 = vunpack.c.l.b16 %v1696
    %v1829 = vunpack.c.l.b16 %v1697
    %v1830 = vunpack.c.l.b16 %v1698
    %v1831 = vunpack.c.l.b16 %v1699
    %v1832 = vunpack.c.l.b16 %v1700
    %v1833 = vunpack.c.l.b16 %v1701
    %v1834 = vunpack.c.l.b16 %v1702
    %v1835 = vunpack.c.l.b16 %v1703
    %v1836 = vunpack.c.l.b16 %v1704
    %v1837 = vunpack.c.l.b16 %v1705
    %v1838 = vunpack.c.l.b16 %v1706
    %v1839 = vunpack.c.l.b16 %v1707
    %v1840 = vunpack.c.l.b16 %v1708
    %v1841 = vunpack.c.l.b16 %v1709
    %v1842 = vunpack.c.l.b16 %v1710
    %v1843 = vunpack.c.l.b16 %v1711
    %v1844 = vunpack.c.l.b16 %v1712
    %v1845 = vunpack.c.l.b16 %v1713
    %v1846 = vunpack.c.l.b16 %v1714
    %v1847 = vunpack.c.l.b16 %v1715
    %v1848 = vpack.c.b16 %v1785, %v1784
    %v1849 = vpack.c.b16 %v1787, %v1786
    %v1850 = vpack.c.b16 %v1789, %v1788
    %v1851 = vpack.c.b16 %v1791, %v1790
    %v1852 = vpack.c.b16 %v1793, %v1792
    %v1853 = vpack.c.b16 %v1795, %v1794
    %v1854 = vpack.c.b16 %v1797, %v1796
    %v1855 = vpack.c.b16 %v1799, %v1798
    %v1856 = vpack.c.b16 %v1801, %v1800
    %v1857 = vpack.c.b16 %v1803, %v1802
    %v1858 = vpack.c.b16 %v1805, %v1804
    %v1859 = vpack.c.b16 %v1807, %v1806
    %v1860 = vpack.c.b16 %v1809, %v1808
    %v1861 = vpack.c.b16 %v1811, %v1810
    %v1862 = vpack.c.b16 %v1813, %v1812
    %v1863 = vpack.c.b16 %v1815, %v1814
    %v1864 = vpack.c.b16 %v1817, %v1816
    %v1865 = vpack.c.b16 %v1819, %v1818
    %v1866 = vpack.c.b16 %v1821, %v1820
    %v1867 = vpack.c.b16 %v1823, %v1822
    %v1868 = vpack.c.b16 %v1825, %v1824
    %v1869 = vpack.c.b16 %v1827, %v1826
    %v1870 = vpack.c.b16 %v1829, %v1828
    %v1871 = vpack.c.b16 %v1831, %v1830
    %v1872 = vpack.c.b16 %v1833, %v1832
    %v1873 = vpack.c.b16 %v1835, %v1834
    %v1874 = vpack.c.b16 %v1837, %v1836
    %v1875 = vpack.c.b16 %v1839, %v1838
    %v1876 = vpack.c.b16 %v1841, %v1840
    %v1877 = vpack.c.b16 %v1843, %v1842
    %v1878 = vpack.c.b16 %v1845, %v1844
    %v1879 = vpack.c.b16 %v1847, %v1846
    %1912 = vmatpush.bf16.msra.mxu0 %v1855
    %1913 = vmatpush.bf16.msra.mxu0 %v1854
    %1914 = vmatpush.bf16.msra.mxu0 %v1853
    %1915 = vmatpush.bf16.msra.mxu0 %v1852
    %1916 = vmatpush.bf16.msra.mxu0 %v1851
    %1917 = vmatpush.bf16.msra.mxu0 %v1850
    %1918 = vmatpush.bf16.msra.mxu0 %v1849
    %1919 = vmatpush.bf16.msra.mxu0 %v1848
    %1920 = vmatmul.bf16.gmra.mxu0 %v1648
    %v1921 = vpop.f32.mrf.mxu0
    %v1922 = vadd.f32 %v1718, %v1921
    %v1923 = vpop.f32.mrf.mxu0
    %1924 = vdwg.mxu0
    %1925 = vmatpush.bf16.msra.mxu0 %v1863
    %1926 = vmatpush.bf16.msra.mxu0 %v1862
    %1927 = vmatpush.bf16.msra.mxu0 %v1861
    %1928 = vmatpush.bf16.msra.mxu0 %v1860
    %1929 = vmatpush.bf16.msra.mxu0 %v1859
    %1930 = vmatpush.bf16.msra.mxu0 %v1858
    %1931 = vmatpush.bf16.msra.mxu0 %v1857
    %1932 = vmatpush.bf16.msra.mxu0 %v1856
    %1933 = vmatmul.bf16.gmra.mxu0 %v1649
    %v1934 = vpop.f32.mrf.mxu0
    %v1935 = vadd.f32 %v1922, %v1934
    %v1936 = vpop.f32.mrf.mxu0
    %1937 = vdwg.mxu0
    %1938 = vmatpush.bf16.msra.mxu0 %v1871
    %1939 = vmatpush.bf16.msra.mxu0 %v1870
    %1940 = vmatpush.bf16.msra.mxu0 %v1869
    %1941 = vmatpush.bf16.msra.mxu0 %v1868
    %1942 = vmatpush.bf16.msra.mxu0 %v1867
    %1943 = vmatpush.bf16.msra.mxu0 %v1866
    %1944 = vmatpush.bf16.msra.mxu0 %v1865
    %1945 = vmatpush.bf16.msra.mxu0 %v1864
    %1946 = vmatmul.bf16.gmra.mxu0 %v1650
    %v1947 = vpop.f32.mrf.mxu0
    %v1948 = vadd.f32 %v1935, %v1947
    %v1949 = vpop.f32.mrf.mxu0
    %1950 = vdwg.mxu0
    %1951 = vmatpush.bf16.msra.mxu0 %v1879
    %1952 = vmatpush.bf16.msra.mxu0 %v1878
    %1953 = vmatpush.bf16.msra.mxu0 %v1877
    %1954 = vmatpush.bf16.msra.mxu0 %v1876
    %1955 = vmatpush.bf16.msra.mxu0 %v1875
    %1956 = vmatpush.bf16.msra.mxu0 %v1874
    %1957 = vmatpush.bf16.msra.mxu0 %v1873
    %1958 = vmatpush.bf16.msra.mxu0 %v1872
    %1959 = vmatmul.bf16.gmra.mxu0 %v1651
    %v1960 = vpop.f32.mrf.mxu0
    %v1961 = vadd.f32 %v1948, %v1960
    %v1962 = vpop.f32.mrf.mxu0
    %1963 = vdwg.mxu0
    %vm1964 = vcmask 23552
    %1965 = vst.msk [vmem:[%s6] sm:$0xff] %vm1964, %v1961
    // Predicated region
    $region30: #{pooling_roberta_head.1} parent=1 // pred_check
      _
    $region31: #{pooling_roberta_head.1} parent=1 // pred_check_branch
      %1967 = sbr.rel (0) target = $region33
    $region32: #{pooling_roberta_head.1} parent=1 // pred_region
      _
    $region33: #{pooling_roberta_head.1} parent=1 // pred_fallthru
      _
    // Predicated region
    $region34: #{pooling_roberta_head.1} parent=1 // pred_check
      _
    $region35: #{pooling_roberta_head.1} parent=1 // pred_check_branch
      %1969 = sbr.rel (0) target = $region37
    $region36: #{pooling_roberta_head.1} parent=1 // pred_region
      _
    $region37: #{pooling_roberta_head.1} parent=1 // pred_fallthru
      _
    %1970 = vsyncpa [#allocation3], 1

</llo_original>
